<compile_context>
chip_gen: v5e
topology: v5e:2x2
jax: 0.10.0
libtpu: 0.0.40
codegen_flags: <defaults>
</compile_context>

<pallas_src>
import functools
import math

import numpy as np
import jax
import jax.numpy as jnp
from jax.experimental import pallas as pl
from jax.experimental.pallas import tpu as pltpu


def _round_up(x, m):
    return ((x + m - 1) // m) * m


# ---------------------------------------------------------------------------
# Kernels
# ---------------------------------------------------------------------------

def _fused_linear_kernel(*refs, n_k, has_ln, has_bias, has_res, activation, eps):
    """o = [res +] act([LN](x) @ w + b).

    refs order: x, w, [ln_gamma, ln_beta], [bias], [residual], out, [acc].
    Grid: (M tiles, N tiles, K tiles); accumulation over the K axis.
    """
    it = iter(refs)
    x_ref = next(it)
    w_ref = next(it)
    g_ref = next(it) if has_ln else None
    bln_ref = next(it) if has_ln else None
    b_ref = next(it) if has_bias else None
    r_ref = next(it) if has_res else None
    o_ref = next(it)
    acc_ref = next(it) if n_k > 1 else None

    k_idx = pl.program_id(2)

    x = x_ref[...].astype(jnp.float32)
    if has_ln:
        # PyTorch LayerNorm semantics (biased variance), f32 math.
        mu = jnp.mean(x, axis=-1, keepdims=True)
        var = jnp.mean(jnp.square(x - mu), axis=-1, keepdims=True)
        x = (x - mu) * jax.lax.rsqrt(var + eps)
        x = x * g_ref[...].astype(jnp.float32) + bln_ref[...].astype(jnp.float32)

    # bf16 operands to the MXU, f32 accumulation.
    prod = jnp.dot(x.astype(jnp.bfloat16), w_ref[...].astype(jnp.bfloat16),
                   preferred_element_type=jnp.float32)

    def epilogue(acc):
        if has_bias:
            acc = acc + b_ref[...].astype(jnp.float32)
        if activation == "quick_gelu":
            acc = acc * jax.nn.sigmoid(1.702 * acc)
        if has_res:
            acc = acc + r_ref[...].astype(jnp.float32)
        o_ref[...] = acc.astype(o_ref.dtype)

    if n_k == 1:
        epilogue(prod)
    else:
        @pl.when(k_idx == 0)
        def _():
            acc_ref[...] = jnp.zeros_like(acc_ref)

        acc_ref[...] += prod

        @pl.when(k_idx == n_k - 1)
        def _():
            epilogue(acc_ref[...])


def _layernorm_kernel(x_ref, g_ref, b_ref, o_ref, *, eps):
    """Row-wise LayerNorm over the last dim (standalone, used for ln_pre)."""
    x = x_ref[...].astype(jnp.float32)
    mu = jnp.mean(x, axis=-1, keepdims=True)
    var = jnp.mean(jnp.square(x - mu), axis=-1, keepdims=True)
    y = (x - mu) * jax.lax.rsqrt(var + eps)
    y = y * g_ref[...].astype(jnp.float32) + b_ref[...].astype(jnp.float32)
    o_ref[...] = y.astype(o_ref.dtype)


def _attention_kernel(qkv_ref, o_ref, *, n_head, hd, seq_len):
    """Per-batch multi-head attention on fused QKV.

    qkv_ref: (1, Lp, 3E) with E = n_head*hd, column layout [Q | K | V].
    The 1/sqrt(hd) scale is already folded into the Q projection weights.
    Padded key positions (>= seq_len) are masked with -inf.
    """
    E = n_head * hd
    qkv = qkv_ref[0]                       # (Lp, 3E)
    Lp = qkv.shape[0]

    mask_pad = Lp > seq_len
    if mask_pad:
        key_ids = jax.lax.broadcasted_iota(jnp.int32, (1, Lp), 1)
        neg = jnp.where(key_ids >= seq_len, -1e30, 0.0).astype(jnp.float32)

    outs = []
    for h in range(n_head):                # static unroll over heads
        q = qkv[:, h * hd:(h + 1) * hd].astype(jnp.bfloat16)
        k = qkv[:, E + h * hd:E + (h + 1) * hd].astype(jnp.bfloat16)
        v = qkv[:, 2 * E + h * hd:2 * E + (h + 1) * hd].astype(jnp.bfloat16)

        # s = q @ k.T  (contract the head dim of both operands on the MXU)
        s = jax.lax.dot_general(q, k, (((1,), (1,)), ((), ())),
                                preferred_element_type=jnp.float32)
        if mask_pad:
            s = s + neg
        s = s - jnp.max(s, axis=-1, keepdims=True)
        p = jnp.exp(s)
        p = p * pl.reciprocal(jnp.sum(p, axis=-1, keepdims=True), approx=True)
        o = jnp.dot(p.astype(jnp.bfloat16), v,
                    preferred_element_type=jnp.float32)      # (Lp, hd)
        outs.append(o)

    # Single lane-dense store of the full (Lp, E) head-concatenated block.
    o_ref[0] = jnp.concatenate(outs, axis=-1).astype(o_ref.dtype)


# ---------------------------------------------------------------------------
# Wrappers
# ---------------------------------------------------------------------------

def pallas_fused_linear(x, w, bias=None, ln=None, residual=None,
                        activation=None, eps=1e-7, out_dtype=None):
    """out = [residual +] act([LN](x) @ w + bias), tiled over (M, N, K)."""
    lead = x.shape[:-1]
    K = x.shape[-1]
    N = w.shape[1]
    M = int(np.prod(lead)) if lead else 1
    out_dtype = out_dtype or x.dtype

    x2 = x.reshape(M, K)
    res2 = residual.reshape(M, N) if residual is not None else None

    # --- tile selection (generation-agnostic, well under scoped VMEM) ---
    tm = min(256, _round_up(M, 8))
    Mp = _round_up(M, tm)
    grid_m = Mp // tm

    if N > 512 and N % 256 == 0:
        tn = 256
    elif N > 512 and N % 128 == 0:
        tn = 128
    else:
        tn = N
    grid_n = N // tn

    if ln is not None:               # LayerNorm needs the full row -> no K tiling
        tk = K
    elif K > 1024 and K % 512 == 0:
        tk = 512
    elif K > 1024 and K % 256 == 0:
        tk = 256
    else:
        tk = K
    grid_k = K // tk

    if Mp != M:
        x2 = jnp.pad(x2, ((0, Mp - M), (0, 0)))
        if res2 is not None:
            res2 = jnp.pad(res2, ((0, Mp - M), (0, 0)))

    in_specs = [pl.BlockSpec((tm, tk), lambda i, j, k: (i, k)),
                pl.BlockSpec((tk, tn), lambda i, j, k: (k, j))]
    args = [x2, w]
    if ln is not None:
        gamma, beta = ln
        in_specs += [pl.BlockSpec((1, K), lambda i, j, k: (0, 0)),
                     pl.BlockSpec((1, K), lambda i, j, k: (0, 0))]
        args += [gamma.reshape(1, K), beta.reshape(1, K)]
    if bias is not None:
        in_specs.append(pl.BlockSpec((1, tn), lambda i, j, k: (0, j)))
        args.append(bias.reshape(1, N))
    if res2 is not None:
        in_specs.append(pl.BlockSpec((tm, tn), lambda i, j, k: (i, j)))
        args.append(res2)

    scratch_shapes = [pltpu.VMEM((tm, tn), jnp.float32)] if grid_k > 1 else []

    cost = pl.CostEstimate(
        flops=2 * Mp * N * K,
        transcendentals=(Mp * N if activation == "quick_gelu" else 0),
        bytes_accessed=int(Mp * K * x2.dtype.itemsize
                           + K * N * w.dtype.itemsize
                           + Mp * N * np.dtype(out_dtype).itemsize),
    )

    out = pl.pallas_call(
        functools.partial(_fused_linear_kernel, n_k=grid_k,
                          has_ln=ln is not None, has_bias=bias is not None,
                          has_res=res2 is not None, activation=activation,
                          eps=eps),
        out_shape=jax.ShapeDtypeStruct((Mp, N), out_dtype),
        grid=(grid_m, grid_n, grid_k),
        in_specs=in_specs,
        out_specs=pl.BlockSpec((tm, tn), lambda i, j, k: (i, j)),
        scratch_shapes=scratch_shapes,
        compiler_params=pltpu.CompilerParams(
            dimension_semantics=("parallel", "parallel", "arbitrary")),
        cost_estimate=cost,
    )(*args)

    if Mp != M:
        out = out[:M]
    return out.reshape(*lead, N)


def pallas_layernorm(x, gamma, beta, eps=1e-7):
    lead = x.shape[:-1]
    E = x.shape[-1]
    M = int(np.prod(lead)) if lead else 1
    x2 = x.reshape(M, E)
    tm = min(256, _round_up(M, 8))
    Mp = _round_up(M, tm)
    if Mp != M:
        x2 = jnp.pad(x2, ((0, Mp - M), (0, 0)))
    out = pl.pallas_call(
        functools.partial(_layernorm_kernel, eps=eps),
        out_shape=jax.ShapeDtypeStruct((Mp, E), x.dtype),
        grid=(Mp // tm,),
        in_specs=[pl.BlockSpec((tm, E), lambda i: (i, 0)),
                  pl.BlockSpec((1, E), lambda i: (0, 0)),
                  pl.BlockSpec((1, E), lambda i: (0, 0))],
        out_specs=pl.BlockSpec((tm, E), lambda i: (i, 0)),
        compiler_params=pltpu.CompilerParams(dimension_semantics=("parallel",)),
    )(x2, gamma.reshape(1, E), beta.reshape(1, E))
    if Mp != M:
        out = out[:M]
    return out.reshape(*lead, E)


def pallas_attention(qkv, n_head, seq_len):
    """qkv: (B, Lp, 3E) fused QKV -> (B, Lp, E) concatenated head outputs."""
    B, Lp, threeE = qkv.shape
    E = threeE // 3
    hd = E // n_head
    cost = pl.CostEstimate(
        flops=4 * B * n_head * Lp * Lp * hd,
        transcendentals=B * n_head * Lp * Lp,
        bytes_accessed=int((B * Lp * threeE + B * Lp * E)
                           * qkv.dtype.itemsize),
    )
    return pl.pallas_call(
        functools.partial(_attention_kernel, n_head=n_head, hd=hd,
                          seq_len=seq_len),
        out_shape=jax.ShapeDtypeStruct((B, Lp, E), qkv.dtype),
        grid=(B,),
        in_specs=[pl.BlockSpec((1, Lp, threeE), lambda b: (b, 0, 0))],
        out_specs=pl.BlockSpec((1, Lp, E), lambda b: (b, 0, 0)),
        compiler_params=pltpu.CompilerParams(dimension_semantics=("parallel",)),
        cost_estimate=cost,
    )(qkv)


# ---------------------------------------------------------------------------
# Model forward (mirrors VisualTransformer.forward)
# ---------------------------------------------------------------------------

def residual_attention_block(x, p, n_head, seq_len):
    """x: (B, Lp, E) f32 residual stream.  (L,B,E) vs (B,L,E) is equivalent
    because attention only mixes within a batch element's sequence."""
    # LN1 fused into the QKV projection (scale pre-folded into Q weights).
    qkv = pallas_fused_linear(x, p["in_proj_w"], bias=p["in_proj_b"],
                              ln=(p["ln1_g"], p["ln1_b"]), eps=1e-7,
                              out_dtype=jnp.bfloat16)
    attn = pallas_attention(qkv, n_head, seq_len)
    # Output projection with the residual add fused into the epilogue.
    x = pallas_fused_linear(attn, p["out_proj_w"], bias=p["out_proj_b"],
                            residual=x, out_dtype=x.dtype)
    # LN2 + c_fc + QuickGELU fused; c_proj + residual fused.
    h = pallas_fused_linear(x, p["fc_w"], bias=p["fc_b"],
                            ln=(p["ln2_g"], p["ln2_b"]), eps=1e-7,
                            activation="quick_gelu", out_dtype=jnp.bfloat16)
    x = pallas_fused_linear(h, p["cproj_w"], bias=p["cproj_b"],
                            residual=x, out_dtype=x.dtype)
    return x


def visual_transformer_forward(x, params, *, patch_size, heads):
    """x: (B, 3, H, W) NCHW float32 -> (B, output_dim)."""
    B, C, H, W = x.shape
    P = patch_size
    Hp, Wp = H // P, W // P

    # conv1 (stride == kernel) as patch extraction + Pallas matmul (MXU).
    # Patch vector ordering is (c_in, kh, kw), matching conv weight flattening.
    patches = (x.reshape(B, C, Hp, P, Wp, P)
                 .transpose(0, 2, 4, 1, 3, 5)
                 .reshape(B, Hp * Wp, C * P * P))
    x = pallas_fused_linear(patches, params["conv_w"],
                            out_dtype=jnp.float32)            # (B, N, width)

    width = x.shape[-1]
    cls = jnp.broadcast_to(params["class_embedding"].reshape(1, 1, width),
                           (B, 1, width)).astype(x.dtype)
    x = jnp.concatenate([cls, x], axis=1)                      # (B, L, width)
    x = x + params["positional_embedding"][None].astype(x.dtype)

    # Pad the sequence to a multiple of 8 once; padded keys are masked in
    # attention and padded rows never feed back into real rows elsewhere.
    L = x.shape[1]
    Lp = _round_up(L, 8)
    if Lp != L:
        x = jnp.pad(x, ((0, 0), (0, Lp - L), (0, 0)))

    x = pallas_layernorm(x, params["ln_pre_g"], params["ln_pre_b"], eps=1e-7)

    for blk in params["blocks"]:
        x = residual_attention_block(x, blk, heads, seq_len=L)

    cls_out = x[:, 0, :]
    # ln_post fused into the final projection.
    out = pallas_fused_linear(cls_out, params["proj"],
                              ln=(params["ln_post_g"], params["ln_post_b"]),
                              eps=1e-7, out_dtype=jnp.float32)
    return out


# ---------------------------------------------------------------------------
# Parameter init / prep + demo
# ---------------------------------------------------------------------------

def init_params(key, *, input_resolution, patch_size, width, layers, heads,
                output_dim):
    scale = width ** (-0.5)
    n_patches = (input_resolution // patch_size) ** 2

    def nrm(k, shape, s):
        return (s * jax.random.normal(k, shape, jnp.float32)).astype(jnp.float32)

    keys = iter(jax.random.split(key, 8 + 8 * layers))
    params = {
        # conv weight stored already flattened/transposed: (3*P*P, width)
        "conv_w": nrm(next(keys), (width, 3, patch_size, patch_size), 0.02)
                  .reshape(width, -1).T,
        "class_embedding": nrm(next(keys), (width,), scale),
        "positional_embedding": nrm(next(keys), (n_patches + 1, width), scale),
        "ln_pre_g": jnp.ones((width,), jnp.float32),
        "ln_pre_b": jnp.zeros((width,), jnp.float32),
        "ln_post_g": jnp.ones((width,), jnp.float32),
        "ln_post_b": jnp.zeros((width,), jnp.float32),
        "proj": nrm(next(keys), (width, output_dim), scale),
        "blocks": [],
    }
    for _ in range(layers):
        blk = {
            "ln1_g": jnp.ones((width,), jnp.float32),
            "ln1_b": jnp.zeros((width,), jnp.float32),
            "ln2_g": jnp.ones((width,), jnp.float32),
            "ln2_b": jnp.zeros((width,), jnp.float32),
            # nn.MultiheadAttention in_proj (stored as (E, 3E) = W_in^T)
            "in_proj_w": nrm(next(keys), (width, 3 * width), 0.02),
            "in_proj_b": nrm(next(keys), (3 * width,), 0.02),
            "out_proj_w": nrm(next(keys), (width, width), 0.02),
            "out_proj_b": nrm(next(keys), (width,), 0.02),
            # MLP c_fc / c_proj (stored as (in, out) = W^T)
            "fc_w": nrm(next(keys), (width, 4 * width), 0.02),
            "fc_b": nrm(next(keys), (4 * width,), 0.02),
            "cproj_w": nrm(next(keys), (4 * width, width), 0.02),
            "cproj_b": nrm(next(keys), (width,), 0.02),
        }
        params["blocks"].append(blk)
    return params


def prepare_params(params, heads):
    """Fold 1/sqrt(head_dim) into the Q projection and cast matmul weights to
    bf16 (MXU operands); biases / LN params / embeddings stay f32."""
    p = dict(params)
    p["conv_w"] = params["conv_w"].astype(jnp.bfloat16)
    p["proj"] = params["proj"].astype(jnp.bfloat16)
    blocks = []
    for blk in params["blocks"]:
        b = dict(blk)
        E = blk["out_proj_w"].shape[0]
        scale = 1.0 / math.sqrt(E // heads)
        w_in = blk["in_proj_w"].at[:, :E].multiply(scale)
        b_in = blk["in_proj_b"].at[:E].multiply(scale)
        b["in_proj_w"] = w_in.astype(jnp.bfloat16)
        b["in_proj_b"] = b_in
        b["out_proj_w"] = blk["out_proj_w"].astype(jnp.bfloat16)
        b["fc_w"] = blk["fc_w"].astype(jnp.bfloat16)
        b["cproj_w"] = blk["cproj_w"].astype(jnp.bfloat16)
        blocks.append(b)
    p["blocks"] = blocks
    return p


if __name__ == "__main__":
    # Small, shape-consistent config.
    input_resolution = 16
    patch_size = 4          # -> 4x4 = 16 patches, seq len = 17 (padded to 24)
    width = 32
    layers = 2
    heads = 4               # head_dim = 8
    output_dim = 16
    batch = 2

    root = jax.random.PRNGKey(0)
    k_params, k_x = jax.random.split(root)
    params = init_params(k_params, input_resolution=input_resolution,
                         patch_size=patch_size, width=width, layers=layers,
                         heads=heads, output_dim=output_dim)
    params = prepare_params(params, heads)

    x = jax.random.normal(k_x, (batch, 3, input_resolution, input_resolution),
                          jnp.float32)

    fwd = jax.jit(functools.partial(visual_transformer_forward,
                                    patch_size=patch_size, heads=heads))
    out = jax.block_until_ready(fwd(x, params))
    assert out.shape == (batch, output_dim), out.shape
    assert jnp.all(jnp.isfinite(out))
    print("KERNEL_OK")
</pallas_src>

<mosaic_0001>
module attributes {stable_mosaic.version = 11 : i64} {
  func.func @_layernorm_kernel(%arg0: i32, %arg1: memref<48x32xf32, #tpu.memory_space<vmem>>, %arg2: memref<1x32xf32, #tpu.memory_space<vmem>>, %arg3: memref<1x32xf32, #tpu.memory_space<vmem>>, %arg4: memref<48x32xf32, #tpu.memory_space<vmem>>) attributes {dimension_semantics = [#tpu.dimension_semantics<parallel>], iteration_bounds = array<i64: 1>, scalar_prefetch = 0 : i64, scratch_operands = 0 : i64, tpu.core_type = #tpu.core_type<tc>, window_params = [{transform_indices = @transform_0, window_bounds = array<i64: 48, 32>}, {pipeline_mode = #tpu.pipeline_mode<synchronous>, transform_indices = @transform_1, window_bounds = array<i64: 1, 32>}, {pipeline_mode = #tpu.pipeline_mode<synchronous>, transform_indices = @transform_2, window_bounds = array<i64: 1, 32>}, {transform_indices = @transform_3, window_bounds = array<i64: 48, 32>}]} {
    %c0 = arith.constant 0 : index
    %c0_0 = arith.constant 0 : index
    %0 = vector.load %arg1[%c0, %c0_0] : memref<48x32xf32, #tpu.memory_space<vmem>>, vector<48x32xf32>
    %cst = arith.constant dense<0.000000e+00> : vector<48xf32>
    %1 = vector.multi_reduction <add>, %0, %cst [1] : vector<48x32xf32> to vector<48xf32>
    %2 = vector.shape_cast %1 : vector<48xf32> to vector<48x1xf32>
    %cst_1 = arith.constant 3.200000e+01 : f32
    %3 = vector.broadcast %cst_1 : f32 to vector<48x1xf32>
    %4 = arith.divf %2, %3 : vector<48x1xf32>
    %5 = vector.broadcast %4 : vector<48x1xf32> to vector<48x32xf32>
    %6 = arith.subf %0, %5 : vector<48x32xf32>
    %7 = arith.mulf %6, %6 : vector<48x32xf32>
    %cst_2 = arith.constant dense<0.000000e+00> : vector<48xf32>
    %8 = vector.multi_reduction <add>, %7, %cst_2 [1] : vector<48x32xf32> to vector<48xf32>
    %9 = vector.shape_cast %8 : vector<48xf32> to vector<48x1xf32>
    %cst_3 = arith.constant 3.200000e+01 : f32
    %10 = vector.broadcast %cst_3 : f32 to vector<48x1xf32>
    %11 = arith.divf %9, %10 : vector<48x1xf32>
    %12 = vector.broadcast %4 : vector<48x1xf32> to vector<48x32xf32>
    %13 = arith.subf %0, %12 : vector<48x32xf32>
    %cst_4 = arith.constant 1.000000e-07 : f32
    %14 = vector.broadcast %cst_4 : f32 to vector<48x1xf32>
    %15 = arith.addf %11, %14 : vector<48x1xf32>
    %16 = math.rsqrt %15 : vector<48x1xf32>
    %17 = vector.broadcast %16 : vector<48x1xf32> to vector<48x32xf32>
    %18 = arith.mulf %13, %17 : vector<48x32xf32>
    %c0_5 = arith.constant 0 : index
    %c0_6 = arith.constant 0 : index
    %19 = vector.load %arg2[%c0_5, %c0_6] : memref<1x32xf32, #tpu.memory_space<vmem>>, vector<1x32xf32>
    %20 = vector.broadcast %19 : vector<1x32xf32> to vector<48x32xf32>
    %21 = arith.mulf %18, %20 : vector<48x32xf32>
    %c0_7 = arith.constant 0 : index
    %c0_8 = arith.constant 0 : index
    %22 = vector.load %arg3[%c0_7, %c0_8] : memref<1x32xf32, #tpu.memory_space<vmem>>, vector<1x32xf32>
    %23 = vector.broadcast %22 : vector<1x32xf32> to vector<48x32xf32>
    %24 = arith.addf %21, %23 : vector<48x32xf32>
    %c0_9 = arith.constant 0 : index
    %c0_10 = arith.constant 0 : index
    %25 = vector.load %arg4[%c0_9, %c0_10] : memref<48x32xf32, #tpu.memory_space<vmem>>, vector<48x32xf32>
    tpu.vector_store %arg4[%c0_9, %c0_10], %24 {strides = array<i32>} : memref<48x32xf32, #tpu.memory_space<vmem>>, vector<48x32xf32>,
    return
  }
  func.func @transform_0(%arg0: i32) -> (i32, i32) {
    %c0_i32 = arith.constant 0 : i32
    %c0_i32_0 = arith.constant 0 : i32
    return %arg0, %c0_i32 : i32, i32
  }
  func.func @transform_1(%arg0: i32) -> (i32, i32) {
    %c0_i32 = arith.constant 0 : i32
    %c0_i32_0 = arith.constant 0 : i32
    %c0_i32_1 = arith.constant 0 : i32
    return %c0_i32, %c0_i32_0 : i32, i32
  }
  func.func @transform_2(%arg0: i32) -> (i32, i32) {
    %c0_i32 = arith.constant 0 : i32
    %c0_i32_0 = arith.constant 0 : i32
    %c0_i32_1 = arith.constant 0 : i32
    return %c0_i32, %c0_i32_0 : i32, i32
  }
  func.func @transform_3(%arg0: i32) -> (i32, i32) {
    %c0_i32 = arith.constant 0 : i32
    %c0_i32_0 = arith.constant 0 : i32
    return %arg0, %c0_i32 : i32, i32
  }
}

module attributes {stable_mosaic.version = 11 : i64} {
  func.func @_fused_linear_kernel(%arg0: i32, %arg1: i32, %arg2: i32, %arg3: memref<32x48xf32, #tpu.memory_space<vmem>>, %arg4: memref<48x32xbf16, #tpu.memory_space<vmem>>, %arg5: memref<32x32xf32, #tpu.memory_space<vmem>>) attributes {dimension_semantics = [#tpu.dimension_semantics<parallel>, #tpu.dimension_semantics<parallel>, #tpu.dimension_semantics<arbitrary>], iteration_bounds = array<i64: 1, 1, 1>, scalar_prefetch = 0 : i64, scratch_operands = 0 : i64, tpu.core_type = #tpu.core_type<tc>, window_params = [{transform_indices = @transform_0, window_bounds = array<i64: 32, 48>}, {transform_indices = @transform_1, window_bounds = array<i64: 48, 32>}, {transform_indices = @transform_2, window_bounds = array<i64: 32, 32>}]} {
    %c0 = arith.constant 0 : index
    %c0_0 = arith.constant 0 : index
    %0 = vector.load %arg3[%c0, %c0_0] : memref<32x48xf32, #tpu.memory_space<vmem>>, vector<32x48xf32>
    %1 = arith.truncf %0 : vector<32x48xf32> to vector<32x48xbf16>
    %c0_1 = arith.constant 0 : index
    %c0_2 = arith.constant 0 : index
    %2 = vector.load %arg4[%c0_1, %c0_2] : memref<48x32xbf16, #tpu.memory_space<vmem>>, vector<48x32xbf16>
    %cst = arith.constant dense<0.000000e+00> : vector<32x32xf32>
    %3 = tpu.matmul %1, %2, %cst {dimension_numbers = #tpu.dot_dimension_numbers<[1], [0], [0], [1], [0, 0, 1, 1], [], []>} : vector<32x48xbf16>, vector<48x32xbf16>, vector<32x32xf32> -> vector<32x32xf32>
    %c0_3 = arith.constant 0 : index
    %c0_4 = arith.constant 0 : index
    %4 = vector.load %arg5[%c0_3, %c0_4] : memref<32x32xf32, #tpu.memory_space<vmem>>, vector<32x32xf32>
    tpu.vector_store %arg5[%c0_3, %c0_4], %3 {strides = array<i32>} : memref<32x32xf32, #tpu.memory_space<vmem>>, vector<32x32xf32>,
    return
  }
  func.func @transform_0(%arg0: i32, %arg1: i32, %arg2: i32) -> (i32, i32) {
    %c0_i32 = arith.constant 0 : i32
    return %arg0, %arg2 : i32, i32
  }
  func.func @transform_1(%arg0: i32, %arg1: i32, %arg2: i32) -> (i32, i32) {
    %c0_i32 = arith.constant 0 : i32
    return %arg2, %arg1 : i32, i32
  }
  func.func @transform_2(%arg0: i32, %arg1: i32, %arg2: i32) -> (i32, i32) {
    %c0_i32 = arith.constant 0 : i32
    return %arg0, %arg1 : i32, i32
  }
}

module attributes {stable_mosaic.version = 11 : i64} {
  func.func @_fused_linear_kernel(%arg0: i32, %arg1: i32, %arg2: i32, %arg3: memref<48x32xf32, #tpu.memory_space<vmem>>, %arg4: memref<32x96xbf16, #tpu.memory_space<vmem>>, %arg5: memref<1x32xf32, #tpu.memory_space<vmem>>, %arg6: memref<1x32xf32, #tpu.memory_space<vmem>>, %arg7: memref<1x96xf32, #tpu.memory_space<vmem>>, %arg8: memref<48x96xbf16, #tpu.memory_space<vmem>>) attributes {dimension_semantics = [#tpu.dimension_semantics<parallel>, #tpu.dimension_semantics<parallel>, #tpu.dimension_semantics<arbitrary>], iteration_bounds = array<i64: 1, 1, 1>, scalar_prefetch = 0 : i64, scratch_operands = 0 : i64, tpu.core_type = #tpu.core_type<tc>, window_params = [{transform_indices = @transform_0, window_bounds = array<i64: 48, 32>}, {transform_indices = @transform_1, window_bounds = array<i64: 32, 96>}, {pipeline_mode = #tpu.pipeline_mode<synchronous>, transform_indices = @transform_2, window_bounds = array<i64: 1, 32>}, {pipeline_mode = #tpu.pipeline_mode<synchronous>, transform_indices = @transform_3, window_bounds = array<i64: 1, 32>}, {transform_indices = @transform_4, window_bounds = array<i64: 1, 96>}, {transform_indices = @transform_5, window_bounds = array<i64: 48, 96>}]} {
    %c0 = arith.constant 0 : index
    %c0_0 = arith.constant 0 : index
    %0 = vector.load %arg3[%c0, %c0_0] : memref<48x32xf32, #tpu.memory_space<vmem>>, vector<48x32xf32>
    %cst = arith.constant dense<0.000000e+00> : vector<48xf32>
    %1 = vector.multi_reduction <add>, %0, %cst [1] : vector<48x32xf32> to vector<48xf32>
    %2 = vector.shape_cast %1 : vector<48xf32> to vector<48x1xf32>
    %cst_1 = arith.constant 3.200000e+01 : f32
    %3 = vector.broadcast %cst_1 : f32 to vector<48x1xf32>
    %4 = arith.divf %2, %3 : vector<48x1xf32>
    %5 = vector.broadcast %4 : vector<48x1xf32> to vector<48x32xf32>
    %6 = arith.subf %0, %5 : vector<48x32xf32>
    %7 = arith.mulf %6, %6 : vector<48x32xf32>
    %cst_2 = arith.constant dense<0.000000e+00> : vector<48xf32>
    %8 = vector.multi_reduction <add>, %7, %cst_2 [1] : vector<48x32xf32> to vector<48xf32>
    %9 = vector.shape_cast %8 : vector<48xf32> to vector<48x1xf32>
    %cst_3 = arith.constant 3.200000e+01 : f32
    %10 = vector.broadcast %cst_3 : f32 to vector<48x1xf32>
    %11 = arith.divf %9, %10 : vector<48x1xf32>
    %12 = vector.broadcast %4 : vector<48x1xf32> to vector<48x32xf32>
    %13 = arith.subf %0, %12 : vector<48x32xf32>
    %cst_4 = arith.constant 1.000000e-07 : f32
    %14 = vector.broadcast %cst_4 : f32 to vector<48x1xf32>
    %15 = arith.addf %11, %14 : vector<48x1xf32>
    %16 = math.rsqrt %15 : vector<48x1xf32>
    %17 = vector.broadcast %16 : vector<48x1xf32> to vector<48x32xf32>
    %18 = arith.mulf %13, %17 : vector<48x32xf32>
    %c0_5 = arith.constant 0 : index
    %c0_6 = arith.constant 0 : index
    %19 = vector.load %arg5[%c0_5, %c0_6] : memref<1x32xf32, #tpu.memory_space<vmem>>, vector<1x32xf32>
    %20 = vector.broadcast %19 : vector<1x32xf32> to vector<48x32xf32>
    %21 = arith.mulf %18, %20 : vector<48x32xf32>
    %c0_7 = arith.constant 0 : index
    %c0_8 = arith.constant 0 : index
    %22 = vector.load %arg6[%c0_7, %c0_8] : memref<1x32xf32, #tpu.memory_space<vmem>>, vector<1x32xf32>
    %23 = vector.broadcast %22 : vector<1x32xf32> to vector<48x32xf32>
    %24 = arith.addf %21, %23 : vector<48x32xf32>
    %25 = arith.truncf %24 : vector<48x32xf32> to vector<48x32xbf16>
    %c0_9 = arith.constant 0 : index
    %c0_10 = arith.constant 0 : index
    %26 = vector.load %arg4[%c0_9, %c0_10] : memref<32x96xbf16, #tpu.memory_space<vmem>>, vector<32x96xbf16>
    %cst_11 = arith.constant dense<0.000000e+00> : vector<48x96xf32>
    %27 = tpu.matmul %25, %26, %cst_11 {dimension_numbers = #tpu.dot_dimension_numbers<[1], [0], [0], [1], [0, 0, 1, 1], [], []>} : vector<48x32xbf16>, vector<32x96xbf16>, vector<48x96xf32> -> vector<48x96xf32>
    %c0_12 = arith.constant 0 : index
    %c0_13 = arith.constant 0 : index
    %28 = vector.load %arg7[%c0_12, %c0_13] : memref<1x96xf32, #tpu.memory_space<vmem>>, vector<1x96xf32>
    %29 = vector.broadcast %28 : vector<1x96xf32> to vector<48x96xf32>
    %30 = arith.addf %27, %29 : vector<48x96xf32>
    %31 = arith.truncf %30 : vector<48x96xf32> to vector<48x96xbf16>
    %c0_14 = arith.constant 0 : index
    %c0_15 = arith.constant 0 : index
    %32 = vector.load %arg8[%c0_14, %c0_15] : memref<48x96xbf16, #tpu.memory_space<vmem>>, vector<48x96xbf16>
    tpu.vector_store %arg8[%c0_14, %c0_15], %31 {strides = array<i32>} : memref<48x96xbf16, #tpu.memory_space<vmem>>, vector<48x96xbf16>,
    return
  }
  func.func @transform_0(%arg0: i32, %arg1: i32, %arg2: i32) -> (i32, i32) {
    %c0_i32 = arith.constant 0 : i32
    return %arg0, %arg2 : i32, i32
  }
  func.func @transform_1(%arg0: i32, %arg1: i32, %arg2: i32) -> (i32, i32) {
    %c0_i32 = arith.constant 0 : i32
    return %arg2, %arg1 : i32, i32
  }
  func.func @transform_2(%arg0: i32, %arg1: i32, %arg2: i32) -> (i32, i32) {
    %c0_i32 = arith.constant 0 : i32
    %c0_i32_0 = arith.constant 0 : i32
    %c0_i32_1 = arith.constant 0 : i32
    return %c0_i32, %c0_i32_0 : i32, i32
  }
  func.func @transform_3(%arg0: i32, %arg1: i32, %arg2: i32) -> (i32, i32) {
    %c0_i32 = arith.constant 0 : i32
    %c0_i32_0 = arith.constant 0 : i32
    %c0_i32_1 = arith.constant 0 : i32
    return %c0_i32, %c0_i32_0 : i32, i32
  }
  func.func @transform_4(%arg0: i32, %arg1: i32, %arg2: i32) -> (i32, i32) {
    %c0_i32 = arith.constant 0 : i32
    %c0_i32_0 = arith.constant 0 : i32
    return %c0_i32, %arg1 : i32, i32
  }
  func.func @transform_5(%arg0: i32, %arg1: i32, %arg2: i32) -> (i32, i32) {
    %c0_i32 = arith.constant 0 : i32
    return %arg0, %arg1 : i32, i32
  }
}

module attributes {stable_mosaic.version = 11 : i64} {
  func.func @_attention_kernel(%arg0: i32, %arg1: memref<1x24x96xbf16, #tpu.memory_space<vmem>>, %arg2: memref<1x24x32xbf16, #tpu.memory_space<vmem>>) attributes {dimension_semantics = [#tpu.dimension_semantics<parallel>], iteration_bounds = array<i64: 2>, scalar_prefetch = 0 : i64, scratch_operands = 0 : i64, tpu.core_type = #tpu.core_type<tc>, window_params = [{transform_indices = @transform_0, window_bounds = array<i64: 1, 24, 96>}, {transform_indices = @transform_1, window_bounds = array<i64: 1, 24, 32>}]} {
    %c0 = arith.constant 0 : index
    %c0_0 = arith.constant 0 : index
    %c0_1 = arith.constant 0 : index
    %0 = vector.load %arg1[%c0, %c0_0, %c0_1] : memref<1x24x96xbf16, #tpu.memory_space<vmem>>, vector<1x24x96xbf16>
    %1 = vector.shape_cast %0 : vector<1x24x96xbf16> to vector<24x96xbf16>
    %2 = tpu.iota {dimensions = array<i32: 1>} : vector<1x24xi32>
    %c17_i32 = arith.constant 17 : i32
    %3 = vector.broadcast %c17_i32 : i32 to vector<1x24xi32>
    %4 = arith.cmpi sge, %2, %3 : vector<1x24xi32>
    %cst = arith.constant -1.000000e+30 : f32
    %cst_2 = arith.constant 0.000000e+00 : f32
    %5 = vector.broadcast %cst : f32 to vector<1x24xf32>
    %6 = vector.broadcast %cst_2 : f32 to vector<1x24xf32>
    %7 = arith.select %4, %5, %6 : vector<1x24xi1>, vector<1x24xf32>
    %8 = vector.extract_strided_slice %1 {offsets = [0, 0], sizes = [24, 8], strides = [1, 1]} : vector<24x96xbf16> to vector<24x8xbf16>
    %9 = vector.extract_strided_slice %1 {offsets = [0, 32], sizes = [24, 8], strides = [1, 1]} : vector<24x96xbf16> to vector<24x8xbf16>
    %10 = vector.extract_strided_slice %1 {offsets = [0, 64], sizes = [24, 8], strides = [1, 1]} : vector<24x96xbf16> to vector<24x8xbf16>
    %cst_3 = arith.constant dense<0.000000e+00> : vector<24x24xf32>
    %11 = tpu.matmul %8, %9, %cst_3 {dimension_numbers = #tpu.dot_dimension_numbers<[1], [1], [0], [0], [0, 0, 1, 0], [], []>} : vector<24x8xbf16>, vector<24x8xbf16>, vector<24x24xf32> -> vector<24x24xf32>
    %12 = vector.broadcast %7 : vector<1x24xf32> to vector<24x24xf32>
    %13 = arith.addf %11, %12 : vector<24x24xf32>
    %cst_4 = arith.constant dense<0xFF800000> : vector<24xf32>
    %14 = vector.multi_reduction <maximumf>, %13, %cst_4 [1] : vector<24x24xf32> to vector<24xf32>
    %15 = vector.shape_cast %14 : vector<24xf32> to vector<24x1xf32>
    %16 = vector.broadcast %15 : vector<24x1xf32> to vector<24x24xf32>
    %17 = arith.subf %13, %16 : vector<24x24xf32>
    %18 = math.exp %17 : vector<24x24xf32>
    %cst_5 = arith.constant dense<0.000000e+00> : vector<24xf32>
    %19 = vector.multi_reduction <add>, %18, %cst_5 [1] : vector<24x24xf32> to vector<24xf32>
    %20 = vector.shape_cast %19 : vector<24xf32> to vector<24x1xf32>
    %21 = tpu.reciprocal %20 {approx = true} : vector<24x1xf32> -> vector<24x1xf32>
    %22 = vector.broadcast %21 : vector<24x1xf32> to vector<24x24xf32>
    %23 = arith.mulf %18, %22 : vector<24x24xf32>
    %24 = arith.truncf %23 : vector<24x24xf32> to vector<24x24xbf16>
    %cst_6 = arith.constant dense<0.000000e+00> : vector<24x8xf32>
    %25 = tpu.matmul %24, %10, %cst_6 {dimension_numbers = #tpu.dot_dimension_numbers<[1], [0], [0], [1], [0, 0, 1, 1], [], []>} : vector<24x24xbf16>, vector<24x8xbf16>, vector<24x8xf32> -> vector<24x8xf32>
    %26 = vector.extract_strided_slice %1 {offsets = [0, 8], sizes = [24, 8], strides = [1, 1]} : vector<24x96xbf16> to vector<24x8xbf16>
    %27 = vector.extract_strided_slice %1 {offsets = [0, 40], sizes = [24, 8], strides = [1, 1]} : vector<24x96xbf16> to vector<24x8xbf16>
    %28 = vector.extract_strided_slice %1 {offsets = [0, 72], sizes = [24, 8], strides = [1, 1]} : vector<24x96xbf16> to vector<24x8xbf16>
    %cst_7 = arith.constant dense<0.000000e+00> : vector<24x24xf32>
    %29 = tpu.matmul %26, %27, %cst_7 {dimension_numbers = #tpu.dot_dimension_numbers<[1], [1], [0], [0], [0, 0, 1, 0], [], []>} : vector<24x8xbf16>, vector<24x8xbf16>, vector<24x24xf32> -> vector<24x24xf32>
    %30 = vector.broadcast %7 : vector<1x24xf32> to vector<24x24xf32>
    %31 = arith.addf %29, %30 : vector<24x24xf32>
    %cst_8 = arith.constant dense<0xFF800000> : vector<24xf32>
    %32 = vector.multi_reduction <maximumf>, %31, %cst_8 [1] : vector<24x24xf32> to vector<24xf32>
    %33 = vector.shape_cast %32 : vector<24xf32> to vector<24x1xf32>
    %34 = vector.broadcast %33 : vector<24x1xf32> to vector<24x24xf32>
    %35 = arith.subf %31, %34 : vector<24x24xf32>
    %36 = math.exp %35 : vector<24x24xf32>
    %cst_9 = arith.constant dense<0.000000e+00> : vector<24xf32>
    %37 = vector.multi_reduction <add>, %36, %cst_9 [1] : vector<24x24xf32> to vector<24xf32>
    %38 = vector.shape_cast %37 : vector<24xf32> to vector<24x1xf32>
    %39 = tpu.reciprocal %38 {approx = true} : vector<24x1xf32> -> vector<24x1xf32>
    %40 = vector.broadcast %39 : vector<24x1xf32> to vector<24x24xf32>
    %41 = arith.mulf %36, %40 : vector<24x24xf32>
    %42 = arith.truncf %41 : vector<24x24xf32> to vector<24x24xbf16>
    %cst_10 = arith.constant dense<0.000000e+00> : vector<24x8xf32>
    %43 = tpu.matmul %42, %28, %cst_10 {dimension_numbers = #tpu.dot_dimension_numbers<[1], [0], [0], [1], [0, 0, 1, 1], [], []>} : vector<24x24xbf16>, vector<24x8xbf16>, vector<24x8xf32> -> vector<24x8xf32>
    %44 = vector.extract_strided_slice %1 {offsets = [0, 16], sizes = [24, 8], strides = [1, 1]} : vector<24x96xbf16> to vector<24x8xbf16>
    %45 = vector.extract_strided_slice %1 {offsets = [0, 48], sizes = [24, 8], strides = [1, 1]} : vector<24x96xbf16> to vector<24x8xbf16>
    %46 = vector.extract_strided_slice %1 {offsets = [0, 80], sizes = [24, 8], strides = [1, 1]} : vector<24x96xbf16> to vector<24x8xbf16>
    %cst_11 = arith.constant dense<0.000000e+00> : vector<24x24xf32>
    %47 = tpu.matmul %44, %45, %cst_11 {dimension_numbers = #tpu.dot_dimension_numbers<[1], [1], [0], [0], [0, 0, 1, 0], [], []>} : vector<24x8xbf16>, vector<24x8xbf16>, vector<24x24xf32> -> vector<24x24xf32>
    %48 = vector.broadcast %7 : vector<1x24xf32> to vector<24x24xf32>
    %49 = arith.addf %47, %48 : vector<24x24xf32>
    %cst_12 = arith.constant dense<0xFF800000> : vector<24xf32>
    %50 = vector.multi_reduction <maximumf>, %49, %cst_12 [1] : vector<24x24xf32> to vector<24xf32>
    %51 = vector.shape_cast %50 : vector<24xf32> to vector<24x1xf32>
    %52 = vector.broadcast %51 : vector<24x1xf32> to vector<24x24xf32>
    %53 = arith.subf %49, %52 : vector<24x24xf32>
    %54 = math.exp %53 : vector<24x24xf32>
    %cst_13 = arith.constant dense<0.000000e+00> : vector<24xf32>
    %55 = vector.multi_reduction <add>, %54, %cst_13 [1] : vector<24x24xf32> to vector<24xf32>
    %56 = vector.shape_cast %55 : vector<24xf32> to vector<24x1xf32>
    %57 = tpu.reciprocal %56 {approx = true} : vector<24x1xf32> -> vector<24x1xf32>
    %58 = vector.broadcast %57 : vector<24x1xf32> to vector<24x24xf32>
    %59 = arith.mulf %54, %58 : vector<24x24xf32>
    %60 = arith.truncf %59 : vector<24x24xf32> to vector<24x24xbf16>
    %cst_14 = arith.constant dense<0.000000e+00> : vector<24x8xf32>
    %61 = tpu.matmul %60, %46, %cst_14 {dimension_numbers = #tpu.dot_dimension_numbers<[1], [0], [0], [1], [0, 0, 1, 1], [], []>} : vector<24x24xbf16>, vector<24x8xbf16>, vector<24x8xf32> -> vector<24x8xf32>
    %62 = vector.extract_strided_slice %1 {offsets = [0, 24], sizes = [24, 8], strides = [1, 1]} : vector<24x96xbf16> to vector<24x8xbf16>
    %63 = vector.extract_strided_slice %1 {offsets = [0, 56], sizes = [24, 8], strides = [1, 1]} : vector<24x96xbf16> to vector<24x8xbf16>
    %64 = vector.extract_strided_slice %1 {offsets = [0, 88], sizes = [24, 8], strides = [1, 1]} : vector<24x96xbf16> to vector<24x8xbf16>
    %cst_15 = arith.constant dense<0.000000e+00> : vector<24x24xf32>
    %65 = tpu.matmul %62, %63, %cst_15 {dimension_numbers = #tpu.dot_dimension_numbers<[1], [1], [0], [0], [0, 0, 1, 0], [], []>} : vector<24x8xbf16>, vector<24x8xbf16>, vector<24x24xf32> -> vector<24x24xf32>
    %66 = vector.broadcast %7 : vector<1x24xf32> to vector<24x24xf32>
    %67 = arith.addf %65, %66 : vector<24x24xf32>
    %cst_16 = arith.constant dense<0xFF800000> : vector<24xf32>
    %68 = vector.multi_reduction <maximumf>, %67, %cst_16 [1] : vector<24x24xf32> to vector<24xf32>
    %69 = vector.shape_cast %68 : vector<24xf32> to vector<24x1xf32>
    %70 = vector.broadcast %69 : vector<24x1xf32> to vector<24x24xf32>
    %71 = arith.subf %67, %70 : vector<24x24xf32>
    %72 = math.exp %71 : vector<24x24xf32>
    %cst_17 = arith.constant dense<0.000000e+00> : vector<24xf32>
    %73 = vector.multi_reduction <add>, %72, %cst_17 [1] : vector<24x24xf32> to vector<24xf32>
    %74 = vector.shape_cast %73 : vector<24xf32> to vector<24x1xf32>
    %75 = tpu.reciprocal %74 {approx = true} : vector<24x1xf32> -> vector<24x1xf32>
    %76 = vector.broadcast %75 : vector<24x1xf32> to vector<24x24xf32>
    %77 = arith.mulf %72, %76 : vector<24x24xf32>
    %78 = arith.truncf %77 : vector<24x24xf32> to vector<24x24xbf16>
    %cst_18 = arith.constant dense<0.000000e+00> : vector<24x8xf32>
    %79 = tpu.matmul %78, %64, %cst_18 {dimension_numbers = #tpu.dot_dimension_numbers<[1], [0], [0], [1], [0, 0, 1, 1], [], []>} : vector<24x24xbf16>, vector<24x8xbf16>, vector<24x8xf32> -> vector<24x8xf32>
    %80 = tpu.concatenate %25, %43, %61, %79 in 1 : vector<24x8xf32>, vector<24x8xf32>, vector<24x8xf32>, vector<24x8xf32> -> vector<24x32xf32>
    %81 = arith.truncf %80 : vector<24x32xf32> to vector<24x32xbf16>
    %c0_19 = arith.constant 0 : index
    %c0_20 = arith.constant 0 : index
    %c0_21 = arith.constant 0 : index
    %82 = vector.load %arg2[%c0_19, %c0_20, %c0_21] : memref<1x24x32xbf16, #tpu.memory_space<vmem>>, vector<1x24x32xbf16>
    %83 = vector.shape_cast %82 : vector<1x24x32xbf16> to vector<24x32xbf16>
    %84 = vector.shape_cast %81 : vector<24x32xbf16> to vector<1x24x32xbf16>
    tpu.vector_store %arg2[%c0_19, %c0_20, %c0_21], %84 {strides = array<i32>} : memref<1x24x32xbf16, #tpu.memory_space<vmem>>, vector<1x24x32xbf16>,
    return
  }
  func.func @transform_0(%arg0: i32) -> (i32, i32, i32) {
    %c0_i32 = arith.constant 0 : i32
    %c0_i32_0 = arith.constant 0 : i32
    %c0_i32_1 = arith.constant 0 : i32
    return %arg0, %c0_i32, %c0_i32_0 : i32, i32, i32
  }
  func.func @transform_1(%arg0: i32) -> (i32, i32, i32) {
    %c0_i32 = arith.constant 0 : i32
    %c0_i32_0 = arith.constant 0 : i32
    %c0_i32_1 = arith.constant 0 : i32
    return %arg0, %c0_i32, %c0_i32_0 : i32, i32, i32
  }
}

module attributes {stable_mosaic.version = 11 : i64} {
  func.func @_fused_linear_kernel(%arg0: i32, %arg1: i32, %arg2: i32, %arg3: memref<48x32xbf16, #tpu.memory_space<vmem>>, %arg4: memref<32x32xbf16, #tpu.memory_space<vmem>>, %arg5: memref<1x32xf32, #tpu.memory_space<vmem>>, %arg6: memref<48x32xf32, #tpu.memory_space<vmem>>, %arg7: memref<48x32xf32, #tpu.memory_space<vmem>>) attributes {dimension_semantics = [#tpu.dimension_semantics<parallel>, #tpu.dimension_semantics<parallel>, #tpu.dimension_semantics<arbitrary>], iteration_bounds = array<i64: 1, 1, 1>, scalar_prefetch = 0 : i64, scratch_operands = 0 : i64, tpu.core_type = #tpu.core_type<tc>, window_params = [{transform_indices = @transform_0, window_bounds = array<i64: 48, 32>}, {transform_indices = @transform_1, window_bounds = array<i64: 32, 32>}, {transform_indices = @transform_2, window_bounds = array<i64: 1, 32>}, {transform_indices = @transform_3, window_bounds = array<i64: 48, 32>}, {transform_indices = @transform_4, window_bounds = array<i64: 48, 32>}]} {
    %c0 = arith.constant 0 : index
    %c0_0 = arith.constant 0 : index
    %0 = vector.load %arg3[%c0, %c0_0] : memref<48x32xbf16, #tpu.memory_space<vmem>>, vector<48x32xbf16>
    %1 = arith.extf %0 : vector<48x32xbf16> to vector<48x32xf32>
    %2 = arith.truncf %1 : vector<48x32xf32> to vector<48x32xbf16>
    %c0_1 = arith.constant 0 : index
    %c0_2 = arith.constant 0 : index
    %3 = vector.load %arg4[%c0_1, %c0_2] : memref<32x32xbf16, #tpu.memory_space<vmem>>, vector<32x32xbf16>
    %cst = arith.constant dense<0.000000e+00> : vector<48x32xf32>
    %4 = tpu.matmul %2, %3, %cst {dimension_numbers = #tpu.dot_dimension_numbers<[1], [0], [0], [1], [0, 0, 1, 1], [], []>} : vector<48x32xbf16>, vector<32x32xbf16>, vector<48x32xf32> -> vector<48x32xf32>
    %c0_3 = arith.constant 0 : index
    %c0_4 = arith.constant 0 : index
    %5 = vector.load %arg5[%c0_3, %c0_4] : memref<1x32xf32, #tpu.memory_space<vmem>>, vector<1x32xf32>
    %6 = vector.broadcast %5 : vector<1x32xf32> to vector<48x32xf32>
    %7 = arith.addf %4, %6 : vector<48x32xf32>
    %c0_5 = arith.constant 0 : index
    %c0_6 = arith.constant 0 : index
    %8 = vector.load %arg6[%c0_5, %c0_6] : memref<48x32xf32, #tpu.memory_space<vmem>>, vector<48x32xf32>
    %9 = arith.addf %7, %8 : vector<48x32xf32>
    %c0_7 = arith.constant 0 : index
    %c0_8 = arith.constant 0 : index
    %10 = vector.load %arg7[%c0_7, %c0_8] : memref<48x32xf32, #tpu.memory_space<vmem>>, vector<48x32xf32>
    tpu.vector_store %arg7[%c0_7, %c0_8], %9 {strides = array<i32>} : memref<48x32xf32, #tpu.memory_space<vmem>>, vector<48x32xf32>,
    return
  }
  func.func @transform_0(%arg0: i32, %arg1: i32, %arg2: i32) -> (i32, i32) {
    %c0_i32 = arith.constant 0 : i32
    return %arg0, %arg2 : i32, i32
  }
  func.func @transform_1(%arg0: i32, %arg1: i32, %arg2: i32) -> (i32, i32) {
    %c0_i32 = arith.constant 0 : i32
    return %arg2, %arg1 : i32, i32
  }
  func.func @transform_2(%arg0: i32, %arg1: i32, %arg2: i32) -> (i32, i32) {
    %c0_i32 = arith.constant 0 : i32
    %c0_i32_0 = arith.constant 0 : i32
    return %c0_i32, %arg1 : i32, i32
  }
  func.func @transform_3(%arg0: i32, %arg1: i32, %arg2: i32) -> (i32, i32) {
    %c0_i32 = arith.constant 0 : i32
    return %arg0, %arg1 : i32, i32
  }
  func.func @transform_4(%arg0: i32, %arg1: i32, %arg2: i32) -> (i32, i32) {
    %c0_i32 = arith.constant 0 : i32
    return %arg0, %arg1 : i32, i32
  }
}

module attributes {stable_mosaic.version = 11 : i64} {
  func.func @_fused_linear_kernel(%arg0: i32, %arg1: i32, %arg2: i32, %arg3: memref<48x32xf32, #tpu.memory_space<vmem>>, %arg4: memref<32x128xbf16, #tpu.memory_space<vmem>>, %arg5: memref<1x32xf32, #tpu.memory_space<vmem>>, %arg6: memref<1x32xf32, #tpu.memory_space<vmem>>, %arg7: memref<1x128xf32, #tpu.memory_space<vmem>>, %arg8: memref<48x128xbf16, #tpu.memory_space<vmem>>) attributes {dimension_semantics = [#tpu.dimension_semantics<parallel>, #tpu.dimension_semantics<parallel>, #tpu.dimension_semantics<arbitrary>], iteration_bounds = array<i64: 1, 1, 1>, scalar_prefetch = 0 : i64, scratch_operands = 0 : i64, tpu.core_type = #tpu.core_type<tc>, window_params = [{transform_indices = @transform_0, window_bounds = array<i64: 48, 32>}, {transform_indices = @transform_1, window_bounds = array<i64: 32, 128>}, {pipeline_mode = #tpu.pipeline_mode<synchronous>, transform_indices = @transform_2, window_bounds = array<i64: 1, 32>}, {pipeline_mode = #tpu.pipeline_mode<synchronous>, transform_indices = @transform_3, window_bounds = array<i64: 1, 32>}, {transform_indices = @transform_4, window_bounds = array<i64: 1, 128>}, {transform_indices = @transform_5, window_bounds = array<i64: 48, 128>}]} {
    %c0 = arith.constant 0 : index
    %c0_0 = arith.constant 0 : index
    %0 = vector.load %arg3[%c0, %c0_0] : memref<48x32xf32, #tpu.memory_space<vmem>>, vector<48x32xf32>
    %cst = arith.constant dense<0.000000e+00> : vector<48xf32>
    %1 = vector.multi_reduction <add>, %0, %cst [1] : vector<48x32xf32> to vector<48xf32>
    %2 = vector.shape_cast %1 : vector<48xf32> to vector<48x1xf32>
    %cst_1 = arith.constant 3.200000e+01 : f32
    %3 = vector.broadcast %cst_1 : f32 to vector<48x1xf32>
    %4 = arith.divf %2, %3 : vector<48x1xf32>
    %5 = vector.broadcast %4 : vector<48x1xf32> to vector<48x32xf32>
    %6 = arith.subf %0, %5 : vector<48x32xf32>
    %7 = arith.mulf %6, %6 : vector<48x32xf32>
    %cst_2 = arith.constant dense<0.000000e+00> : vector<48xf32>
    %8 = vector.multi_reduction <add>, %7, %cst_2 [1] : vector<48x32xf32> to vector<48xf32>
    %9 = vector.shape_cast %8 : vector<48xf32> to vector<48x1xf32>
    %cst_3 = arith.constant 3.200000e+01 : f32
    %10 = vector.broadcast %cst_3 : f32 to vector<48x1xf32>
    %11 = arith.divf %9, %10 : vector<48x1xf32>
    %12 = vector.broadcast %4 : vector<48x1xf32> to vector<48x32xf32>
    %13 = arith.subf %0, %12 : vector<48x32xf32>
    %cst_4 = arith.constant 1.000000e-07 : f32
    %14 = vector.broadcast %cst_4 : f32 to vector<48x1xf32>
    %15 = arith.addf %11, %14 : vector<48x1xf32>
    %16 = math.rsqrt %15 : vector<48x1xf32>
    %17 = vector.broadcast %16 : vector<48x1xf32> to vector<48x32xf32>
    %18 = arith.mulf %13, %17 : vector<48x32xf32>
    %c0_5 = arith.constant 0 : index
    %c0_6 = arith.constant 0 : index
    %19 = vector.load %arg5[%c0_5, %c0_6] : memref<1x32xf32, #tpu.memory_space<vmem>>, vector<1x32xf32>
    %20 = vector.broadcast %19 : vector<1x32xf32> to vector<48x32xf32>
    %21 = arith.mulf %18, %20 : vector<48x32xf32>
    %c0_7 = arith.constant 0 : index
    %c0_8 = arith.constant 0 : index
    %22 = vector.load %arg6[%c0_7, %c0_8] : memref<1x32xf32, #tpu.memory_space<vmem>>, vector<1x32xf32>
    %23 = vector.broadcast %22 : vector<1x32xf32> to vector<48x32xf32>
    %24 = arith.addf %21, %23 : vector<48x32xf32>
    %25 = arith.truncf %24 : vector<48x32xf32> to vector<48x32xbf16>
    %c0_9 = arith.constant 0 : index
    %c0_10 = arith.constant 0 : index
    %26 = vector.load %arg4[%c0_9, %c0_10] : memref<32x128xbf16, #tpu.memory_space<vmem>>, vector<32x128xbf16>
    %cst_11 = arith.constant dense<0.000000e+00> : vector<48x128xf32>
    %27 = tpu.matmul %25, %26, %cst_11 {dimension_numbers = #tpu.dot_dimension_numbers<[1], [0], [0], [1], [0, 0, 1, 1], [], []>} : vector<48x32xbf16>, vector<32x128xbf16>, vector<48x128xf32> -> vector<48x128xf32>
    %c0_12 = arith.constant 0 : index
    %c0_13 = arith.constant 0 : index
    %28 = vector.load %arg7[%c0_12, %c0_13] : memref<1x128xf32, #tpu.memory_space<vmem>>, vector<1x128xf32>
    %29 = vector.broadcast %28 : vector<1x128xf32> to vector<48x128xf32>
    %30 = arith.addf %27, %29 : vector<48x128xf32>
    %cst_14 = arith.constant 1.702000e+00 : f32
    %31 = vector.broadcast %cst_14 : f32 to vector<48x128xf32>
    %32 = arith.mulf %31, %30 : vector<48x128xf32>
    %33 = arith.negf %32 : vector<48x128xf32>
    %34 = math.exp %33 : vector<48x128xf32>
    %cst_15 = arith.constant 1.000000e+00 : f32
    %35 = vector.broadcast %cst_15 : f32 to vector<48x128xf32>
    %36 = arith.addf %35, %34 : vector<48x128xf32>
    %37 = arith.divf %35, %36 : vector<48x128xf32>
    %38 = arith.mulf %30, %37 : vector<48x128xf32>
    %39 = arith.truncf %38 : vector<48x128xf32> to vector<48x128xbf16>
    %c0_16 = arith.constant 0 : index
    %c0_17 = arith.constant 0 : index
    %40 = vector.load %arg8[%c0_16, %c0_17] : memref<48x128xbf16, #tpu.memory_space<vmem>>, vector<48x128xbf16>
    tpu.vector_store %arg8[%c0_16, %c0_17], %39 {strides = array<i32>} : memref<48x128xbf16, #tpu.memory_space<vmem>>, vector<48x128xbf16>,
    return
  }
  func.func @transform_0(%arg0: i32, %arg1: i32, %arg2: i32) -> (i32, i32) {
    %c0_i32 = arith.constant 0 : i32
    return %arg0, %arg2 : i32, i32
  }
  func.func @transform_1(%arg0: i32, %arg1: i32, %arg2: i32) -> (i32, i32) {
    %c0_i32 = arith.constant 0 : i32
    return %arg2, %arg1 : i32, i32
  }
  func.func @transform_2(%arg0: i32, %arg1: i32, %arg2: i32) -> (i32, i32) {
    %c0_i32 = arith.constant 0 : i32
    %c0_i32_0 = arith.constant 0 : i32
    %c0_i32_1 = arith.constant 0 : i32
    return %c0_i32, %c0_i32_0 : i32, i32
  }
  func.func @transform_3(%arg0: i32, %arg1: i32, %arg2: i32) -> (i32, i32) {
    %c0_i32 = arith.constant 0 : i32
    %c0_i32_0 = arith.constant 0 : i32
    %c0_i32_1 = arith.constant 0 : i32
    return %c0_i32, %c0_i32_0 : i32, i32
  }
  func.func @transform_4(%arg0: i32, %arg1: i32, %arg2: i32) -> (i32, i32) {
    %c0_i32 = arith.constant 0 : i32
    %c0_i32_0 = arith.constant 0 : i32
    return %c0_i32, %arg1 : i32, i32
  }
  func.func @transform_5(%arg0: i32, %arg1: i32, %arg2: i32) -> (i32, i32) {
    %c0_i32 = arith.constant 0 : i32
    return %arg0, %arg1 : i32, i32
  }
}

module attributes {stable_mosaic.version = 11 : i64} {
  func.func @_fused_linear_kernel(%arg0: i32, %arg1: i32, %arg2: i32, %arg3: memref<48x128xbf16, #tpu.memory_space<vmem>>, %arg4: memref<128x32xbf16, #tpu.memory_space<vmem>>, %arg5: memref<1x32xf32, #tpu.memory_space<vmem>>, %arg6: memref<48x32xf32, #tpu.memory_space<vmem>>, %arg7: memref<48x32xf32, #tpu.memory_space<vmem>>) attributes {dimension_semantics = [#tpu.dimension_semantics<parallel>, #tpu.dimension_semantics<parallel>, #tpu.dimension_semantics<arbitrary>], iteration_bounds = array<i64: 1, 1, 1>, scalar_prefetch = 0 : i64, scratch_operands = 0 : i64, tpu.core_type = #tpu.core_type<tc>, window_params = [{transform_indices = @transform_0, window_bounds = array<i64: 48, 128>}, {transform_indices = @transform_1, window_bounds = array<i64: 128, 32>}, {transform_indices = @transform_2, window_bounds = array<i64: 1, 32>}, {transform_indices = @transform_3, window_bounds = array<i64: 48, 32>}, {transform_indices = @transform_4, window_bounds = array<i64: 48, 32>}]} {
    %c0 = arith.constant 0 : index
    %c0_0 = arith.constant 0 : index
    %0 = vector.load %arg3[%c0, %c0_0] : memref<48x128xbf16, #tpu.memory_space<vmem>>, vector<48x128xbf16>
    %1 = arith.extf %0 : vector<48x128xbf16> to vector<48x128xf32>
    %2 = arith.truncf %1 : vector<48x128xf32> to vector<48x128xbf16>
    %c0_1 = arith.constant 0 : index
    %c0_2 = arith.constant 0 : index
    %3 = vector.load %arg4[%c0_1, %c0_2] : memref<128x32xbf16, #tpu.memory_space<vmem>>, vector<128x32xbf16>
    %cst = arith.constant dense<0.000000e+00> : vector<48x32xf32>
    %4 = tpu.matmul %2, %3, %cst {dimension_numbers = #tpu.dot_dimension_numbers<[1], [0], [0], [1], [0, 0, 1, 1], [], []>} : vector<48x128xbf16>, vector<128x32xbf16>, vector<48x32xf32> -> vector<48x32xf32>
    %c0_3 = arith.constant 0 : index
    %c0_4 = arith.constant 0 : index
    %5 = vector.load %arg5[%c0_3, %c0_4] : memref<1x32xf32, #tpu.memory_space<vmem>>, vector<1x32xf32>
    %6 = vector.broadcast %5 : vector<1x32xf32> to vector<48x32xf32>
    %7 = arith.addf %4, %6 : vector<48x32xf32>
    %c0_5 = arith.constant 0 : index
    %c0_6 = arith.constant 0 : index
    %8 = vector.load %arg6[%c0_5, %c0_6] : memref<48x32xf32, #tpu.memory_space<vmem>>, vector<48x32xf32>
    %9 = arith.addf %7, %8 : vector<48x32xf32>
    %c0_7 = arith.constant 0 : index
    %c0_8 = arith.constant 0 : index
    %10 = vector.load %arg7[%c0_7, %c0_8] : memref<48x32xf32, #tpu.memory_space<vmem>>, vector<48x32xf32>
    tpu.vector_store %arg7[%c0_7, %c0_8], %9 {strides = array<i32>} : memref<48x32xf32, #tpu.memory_space<vmem>>, vector<48x32xf32>,
    return
  }
  func.func @transform_0(%arg0: i32, %arg1: i32, %arg2: i32) -> (i32, i32) {
    %c0_i32 = arith.constant 0 : i32
    return %arg0, %arg2 : i32, i32
  }
  func.func @transform_1(%arg0: i32, %arg1: i32, %arg2: i32) -> (i32, i32) {
    %c0_i32 = arith.constant 0 : i32
    return %arg2, %arg1 : i32, i32
  }
  func.func @transform_2(%arg0: i32, %arg1: i32, %arg2: i32) -> (i32, i32) {
    %c0_i32 = arith.constant 0 : i32
    %c0_i32_0 = arith.constant 0 : i32
    return %c0_i32, %arg1 : i32, i32
  }
  func.func @transform_3(%arg0: i32, %arg1: i32, %arg2: i32) -> (i32, i32) {
    %c0_i32 = arith.constant 0 : i32
    return %arg0, %arg1 : i32, i32
  }
  func.func @transform_4(%arg0: i32, %arg1: i32, %arg2: i32) -> (i32, i32) {
    %c0_i32 = arith.constant 0 : i32
    return %arg0, %arg1 : i32, i32
  }
}

module attributes {stable_mosaic.version = 11 : i64} {
  func.func @_fused_linear_kernel(%arg0: i32, %arg1: i32, %arg2: i32, %arg3: memref<8x32xf32, #tpu.memory_space<vmem>>, %arg4: memref<32x16xbf16, #tpu.memory_space<vmem>>, %arg5: memref<1x32xf32, #tpu.memory_space<vmem>>, %arg6: memref<1x32xf32, #tpu.memory_space<vmem>>, %arg7: memref<8x16xf32, #tpu.memory_space<vmem>>) attributes {dimension_semantics = [#tpu.dimension_semantics<parallel>, #tpu.dimension_semantics<parallel>, #tpu.dimension_semantics<arbitrary>], iteration_bounds = array<i64: 1, 1, 1>, scalar_prefetch = 0 : i64, scratch_operands = 0 : i64, tpu.core_type = #tpu.core_type<tc>, window_params = [{transform_indices = @transform_0, window_bounds = array<i64: 8, 32>}, {transform_indices = @transform_1, window_bounds = array<i64: 32, 16>}, {pipeline_mode = #tpu.pipeline_mode<synchronous>, transform_indices = @transform_2, window_bounds = array<i64: 1, 32>}, {pipeline_mode = #tpu.pipeline_mode<synchronous>, transform_indices = @transform_3, window_bounds = array<i64: 1, 32>}, {transform_indices = @transform_4, window_bounds = array<i64: 8, 16>}]} {
    %c0 = arith.constant 0 : index
    %c0_0 = arith.constant 0 : index
    %0 = vector.load %arg3[%c0, %c0_0] : memref<8x32xf32, #tpu.memory_space<vmem>>, vector<8x32xf32>
    %cst = arith.constant dense<0.000000e+00> : vector<8xf32>
    %1 = vector.multi_reduction <add>, %0, %cst [1] : vector<8x32xf32> to vector<8xf32>
    %2 = vector.shape_cast %1 : vector<8xf32> to vector<8x1xf32>
    %cst_1 = arith.constant 3.200000e+01 : f32
    %3 = vector.broadcast %cst_1 : f32 to vector<8x1xf32>
    %4 = arith.divf %2, %3 : vector<8x1xf32>
    %5 = vector.broadcast %4 : vector<8x1xf32> to vector<8x32xf32>
    %6 = arith.subf %0, %5 : vector<8x32xf32>
    %7 = arith.mulf %6, %6 : vector<8x32xf32>
    %cst_2 = arith.constant dense<0.000000e+00> : vector<8xf32>
    %8 = vector.multi_reduction <add>, %7, %cst_2 [1] : vector<8x32xf32> to vector<8xf32>
    %9 = vector.shape_cast %8 : vector<8xf32> to vector<8x1xf32>
    %cst_3 = arith.constant 3.200000e+01 : f32
    %10 = vector.broadcast %cst_3 : f32 to vector<8x1xf32>
    %11 = arith.divf %9, %10 : vector<8x1xf32>
    %12 = vector.broadcast %4 : vector<8x1xf32> to vector<8x32xf32>
    %13 = arith.subf %0, %12 : vector<8x32xf32>
    %cst_4 = arith.constant 1.000000e-07 : f32
    %14 = vector.broadcast %cst_4 : f32 to vector<8x1xf32>
    %15 = arith.addf %11, %14 : vector<8x1xf32>
    %16 = math.rsqrt %15 : vector<8x1xf32>
    %17 = vector.broadcast %16 : vector<8x1xf32> to vector<8x32xf32>
    %18 = arith.mulf %13, %17 : vector<8x32xf32>
    %c0_5 = arith.constant 0 : index
    %c0_6 = arith.constant 0 : index
    %19 = vector.load %arg5[%c0_5, %c0_6] : memref<1x32xf32, #tpu.memory_space<vmem>>, vector<1x32xf32>
    %20 = vector.broadcast %19 : vector<1x32xf32> to vector<8x32xf32>
    %21 = arith.mulf %18, %20 : vector<8x32xf32>
    %c0_7 = arith.constant 0 : index
    %c0_8 = arith.constant 0 : index
    %22 = vector.load %arg6[%c0_7, %c0_8] : memref<1x32xf32, #tpu.memory_space<vmem>>, vector<1x32xf32>
    %23 = vector.broadcast %22 : vector<1x32xf32> to vector<8x32xf32>
    %24 = arith.addf %21, %23 : vector<8x32xf32>
    %25 = arith.truncf %24 : vector<8x32xf32> to vector<8x32xbf16>
    %c0_9 = arith.constant 0 : index
    %c0_10 = arith.constant 0 : index
    %26 = vector.load %arg4[%c0_9, %c0_10] : memref<32x16xbf16, #tpu.memory_space<vmem>>, vector<32x16xbf16>
    %cst_11 = arith.constant dense<0.000000e+00> : vector<8x16xf32>
    %27 = tpu.matmul %25, %26, %cst_11 {dimension_numbers = #tpu.dot_dimension_numbers<[1], [0], [0], [1], [0, 0, 1, 1], [], []>} : vector<8x32xbf16>, vector<32x16xbf16>, vector<8x16xf32> -> vector<8x16xf32>
    %c0_12 = arith.constant 0 : index
    %c0_13 = arith.constant 0 : index
    %28 = vector.load %arg7[%c0_12, %c0_13] : memref<8x16xf32, #tpu.memory_space<vmem>>, vector<8x16xf32>
    tpu.vector_store %arg7[%c0_12, %c0_13], %27 {strides = array<i32>} : memref<8x16xf32, #tpu.memory_space<vmem>>, vector<8x16xf32>,
    return
  }
  func.func @transform_0(%arg0: i32, %arg1: i32, %arg2: i32) -> (i32, i32) {
    %c0_i32 = arith.constant 0 : i32
    return %arg0, %arg2 : i32, i32
  }
  func.func @transform_1(%arg0: i32, %arg1: i32, %arg2: i32) -> (i32, i32) {
    %c0_i32 = arith.constant 0 : i32
    return %arg2, %arg1 : i32, i32
  }
  func.func @transform_2(%arg0: i32, %arg1: i32, %arg2: i32) -> (i32, i32) {
    %c0_i32 = arith.constant 0 : i32
    %c0_i32_0 = arith.constant 0 : i32
    %c0_i32_1 = arith.constant 0 : i32
    return %c0_i32, %c0_i32_0 : i32, i32
  }
  func.func @transform_3(%arg0: i32, %arg1: i32, %arg2: i32) -> (i32, i32) {
    %c0_i32 = arith.constant 0 : i32
    %c0_i32_0 = arith.constant 0 : i32
    %c0_i32_1 = arith.constant 0 : i32
    return %c0_i32, %c0_i32_0 : i32, i32
  }
  func.func @transform_4(%arg0: i32, %arg1: i32, %arg2: i32) -> (i32, i32) {
    %c0_i32 = arith.constant 0 : i32
    return %arg0, %arg1 : i32, i32
  }
}

</mosaic_0001>

<llo_original>
// kernel: visual_transformer_forward.14
$region0: #{visual_transformer_forward.14}
  #allocation0 [shape = 'u32[]', space=smem, size = 0x4, offset = 0x4, fixed_abs, tag = 'smem constant byte address 0x4 - core index']
  #allocation1 [shape = 'u32[72,128]{1,0:T(1,128)}', space=vmem, size = 0x9000, scoped, tag = 'internal scratch']
  %s0 = inlined_call_operand.vmem [shape: f32[48,32], index: 0, kind: input, shape index: {}]
  %s1 = inlined_call_operand.vmem [shape: f32[1,32], index: 1, kind: input, shape index: {}]
  %s2 = inlined_call_operand.vmem [shape: f32[1,32], index: 2, kind: input, shape index: {}]
  %s3 = inlined_call_operand.vmem [shape: f32[48,32], index: 3, kind: output, shape index: {}]
  %s4 = sld [smem:[#allocation0]]
  $region22: #{visual_transformer_forward.14} parent=0
    _
  %s6 = ssub.s32 1, %s4
  %s7 = scalar_select 0, %s6, %s4
  // Predicated region
  $region2: #{visual_transformer_forward.14} parent=0 // pred_check
    _
  $region3: #{visual_transformer_forward.14} parent=0 // pred_check_branch
    %9 = sbr.rel (0) target = $region5
  $region4: #{visual_transformer_forward.14} parent=0 // pred_region
    _
  $region5: #{visual_transformer_forward.14} parent=0 // pred_fallthru
    _
  // Predicated region
  $region6: #{visual_transformer_forward.14} parent=0 // pred_check
    _
  $region7: #{visual_transformer_forward.14} parent=0 // pred_check_branch
    %11 = sbr.rel (0) target = $region9
  $region8: #{visual_transformer_forward.14} parent=0 // pred_region
    _
  $region9: #{visual_transformer_forward.14} parent=0 // pred_fallthru
    _
  // Predicated region
  $region10: #{visual_transformer_forward.14} parent=0 // pred_check
    _
  $region11: #{visual_transformer_forward.14} parent=0 // pred_check_branch
    %13 = sbr.rel (0) target = $region13
  $region12: #{visual_transformer_forward.14} parent=0 // pred_region
    _
  $region13: #{visual_transformer_forward.14} parent=0 // pred_fallthru
    _
  %v14 = vld [vmem:[%s0] sm:$0xff]
  %v15 = vld [vmem:[%s0 + $0x8] sm:$0xff]
  %v16 = vld [vmem:[%s0 + $0x10] sm:$0xff]
  %v17 = vld [vmem:[%s0 + $0x18] sm:$0xff]
  %v18 = vld [vmem:[%s0 + $0x20] sm:$0xff]
  %v19 = vld [vmem:[%s0 + $0x28] sm:$0xff]
  %vm20 = vcmask 261120
  %v21 = vsel %vm20, %v14, 0.0
  %22 = vadd.xlane.f32.xlu0 %v21
  %v23 = vpop.xlane.xlu0 %22
  %v24 = vsel %vm20, %v15, 0.0
  %25 = vadd.xlane.f32.xlu0 %v24
  %v26 = vpop.xlane.xlu0 %25
  %v27 = vsel %vm20, %v16, 0.0
  %28 = vadd.xlane.f32.xlu0 %v27
  %v29 = vpop.xlane.xlu0 %28
  %v30 = vsel %vm20, %v17, 0.0
  %31 = vadd.xlane.f32.xlu0 %v30
  %v32 = vpop.xlane.xlu0 %31
  %v33 = vsel %vm20, %v18, 0.0
  %34 = vadd.xlane.f32.xlu0 %v33
  %v35 = vpop.xlane.xlu0 %34
  %v36 = vsel %vm20, %v19, 0.0
  %37 = vadd.xlane.f32.xlu0 %v36
  %v38 = vpop.xlane.xlu0 %37
  %v39 = vrcp.pop 32.0
  %v40 = vmul.f32 32.0, %v39
  %v41 = vsub.f32 1.0, %v40
  %v42 = vmul.f32 %v39, %v41
  %v43 = vadd.f32 %v39, %v42
  %vm44 = vweird.f32 %v39
  %v45 = vsel %vm44, %v39, %v43
  %v46 = vmul.f32 %v23, %v45
  %v47 = vmul.f32 %v26, %v45
  %v48 = vmul.f32 %v29, %v45
  %v49 = vmul.f32 %v32, %v45
  %v50 = vmul.f32 %v35, %v45
  %v51 = vmul.f32 %v38, %v45
  %v52 = vsub.f32 %v14, %v46
  %v53 = vsub.f32 %v15, %v47
  %v54 = vsub.f32 %v16, %v48
  %v55 = vsub.f32 %v17, %v49
  %v56 = vsub.f32 %v18, %v50
  %v57 = vsub.f32 %v19, %v51
  %v58 = vmul.f32 %v52, %v52
  %v59 = vmul.f32 %v53, %v53
  %v60 = vmul.f32 %v54, %v54
  %v61 = vmul.f32 %v55, %v55
  %v62 = vmul.f32 %v56, %v56
  %v63 = vmul.f32 %v57, %v57
  %v64 = vsel %vm20, %v58, 0.0
  %65 = vadd.xlane.f32.xlu0 %v64
  %v66 = vpop.xlane.xlu0 %65
  %v67 = vsel %vm20, %v59, 0.0
  %68 = vadd.xlane.f32.xlu0 %v67
  %v69 = vpop.xlane.xlu0 %68
  %v70 = vsel %vm20, %v60, 0.0
  %71 = vadd.xlane.f32.xlu0 %v70
  %v72 = vpop.xlane.xlu0 %71
  %v73 = vsel %vm20, %v61, 0.0
  %74 = vadd.xlane.f32.xlu0 %v73
  %v75 = vpop.xlane.xlu0 %74
  %v76 = vsel %vm20, %v62, 0.0
  %77 = vadd.xlane.f32.xlu0 %v76
  %v78 = vpop.xlane.xlu0 %77
  %v79 = vsel %vm20, %v63, 0.0
  %80 = vadd.xlane.f32.xlu0 %v79
  %v81 = vpop.xlane.xlu0 %80
  %v82 = vmul.f32 %v66, %v45
  %v83 = vmul.f32 %v69, %v45
  %v84 = vmul.f32 %v72, %v45
  %v85 = vmul.f32 %v75, %v45
  %v86 = vmul.f32 %v78, %v45
  %v87 = vmul.f32 %v81, %v45
  %v88 = vadd.f32 %v82, 1e-07
  %v89 = vadd.f32 %v83, 1e-07
  %v90 = vadd.f32 %v84, 1e-07
  %v91 = vadd.f32 %v85, 1e-07
  %v92 = vadd.f32 %v86, 1e-07
  %v93 = vadd.f32 %v87, 1e-07
  %v94 = vrsqrt.pop %v88
  %v95 = vmul.f32 %v94, %v88
  %v96 = vmul.f32 %v95, %v94
  %v97 = vmul.f32 0.5, %v96
  %v98 = vsub.f32 1.5, %v97
  %v99 = vmul.f32 %v94, %v98
  %vm100 = vweird.f32 %v88
  %vm101 = vweird.f32 %v94
  %vm102 = vmor %vm100, %vm101
  %v103 = vsel %vm102, %v94, %v99
  %v104 = vrsqrt.pop %v89
  %v105 = vmul.f32 %v104, %v89
  %v106 = vmul.f32 %v105, %v104
  %v107 = vmul.f32 0.5, %v106
  %v108 = vsub.f32 1.5, %v107
  %v109 = vmul.f32 %v104, %v108
  %vm110 = vweird.f32 %v89
  %vm111 = vweird.f32 %v104
  %vm112 = vmor %vm110, %vm111
  %v113 = vsel %vm112, %v104, %v109
  %v114 = vrsqrt.pop %v90
  %v115 = vmul.f32 %v114, %v90
  %v116 = vmul.f32 %v115, %v114
  %v117 = vmul.f32 0.5, %v116
  %v118 = vsub.f32 1.5, %v117
  %v119 = vmul.f32 %v114, %v118
  %vm120 = vweird.f32 %v90
  %vm121 = vweird.f32 %v114
  %vm122 = vmor %vm120, %vm121
  %v123 = vsel %vm122, %v114, %v119
  %v124 = vrsqrt.pop %v91
  %v125 = vmul.f32 %v124, %v91
  %v126 = vmul.f32 %v125, %v124
  %v127 = vmul.f32 0.5, %v126
  %v128 = vsub.f32 1.5, %v127
  %v129 = vmul.f32 %v124, %v128
  %vm130 = vweird.f32 %v91
  %vm131 = vweird.f32 %v124
  %vm132 = vmor %vm130, %vm131
  %v133 = vsel %vm132, %v124, %v129
  %v134 = vrsqrt.pop %v92
  %v135 = vmul.f32 %v134, %v92
  %v136 = vmul.f32 %v135, %v134
  %v137 = vmul.f32 0.5, %v136
  %v138 = vsub.f32 1.5, %v137
  %v139 = vmul.f32 %v134, %v138
  %vm140 = vweird.f32 %v92
  %vm141 = vweird.f32 %v134
  %vm142 = vmor %vm140, %vm141
  %v143 = vsel %vm142, %v134, %v139
  %v144 = vrsqrt.pop %v93
  %v145 = vmul.f32 %v144, %v93
  %v146 = vmul.f32 %v145, %v144
  %v147 = vmul.f32 0.5, %v146
  %v148 = vsub.f32 1.5, %v147
  %v149 = vmul.f32 %v144, %v148
  %vm150 = vweird.f32 %v93
  %vm151 = vweird.f32 %v144
  %vm152 = vmor %vm150, %vm151
  %v153 = vsel %vm152, %v144, %v149
  %v154 = vmul.f32 %v52, %v103
  %v155 = vmul.f32 %v53, %v113
  %v156 = vmul.f32 %v54, %v123
  %v157 = vmul.f32 %v55, %v133
  %v158 = vmul.f32 %v56, %v143
  %v159 = vmul.f32 %v57, %v153
  %v160 = vld [vmem:[%s1] sm:$0x1]
  %v162 = vperm.slane %v160, 0
  %v164 = vmul.f32 %v154, %v162
  %v165 = vmul.f32 %v155, %v162
  %v166 = vmul.f32 %v156, %v162
  %v167 = vmul.f32 %v157, %v162
  %v168 = vmul.f32 %v158, %v162
  %v169 = vmul.f32 %v159, %v162
  %v170 = vld [vmem:[%s2] sm:$0x1]
  %v172 = vperm.slane %v170, 0
  %v174 = vadd.f32 %v164, %v172
  %v175 = vadd.f32 %v165, %v172
  %v176 = vadd.f32 %v166, %v172
  %v177 = vadd.f32 %v167, %v172
  %v178 = vadd.f32 %v168, %v172
  %v179 = vadd.f32 %v169, %v172
  %180 = vst.msk [vmem:[%s3] sm:$0xff] %vm20, %v174
  %181 = vst.msk [vmem:[%s3 + $0x8] sm:$0xff] %vm20, %v175
  %182 = vst.msk [vmem:[%s3 + $0x10] sm:$0xff] %vm20, %v176
  %183 = vst.msk [vmem:[%s3 + $0x18] sm:$0xff] %vm20, %v177
  %184 = vst.msk [vmem:[%s3 + $0x20] sm:$0xff] %vm20, %v178
  %185 = vst.msk [vmem:[%s3 + $0x28] sm:$0xff] %vm20, %v179
  // Predicated region
  $region14: #{visual_transformer_forward.14} parent=0 // pred_check
    _
  $region15: #{visual_transformer_forward.14} parent=0 // pred_check_branch
    %187 = sbr.rel (0) target = $region17
  $region16: #{visual_transformer_forward.14} parent=0 // pred_region
    _
  $region17: #{visual_transformer_forward.14} parent=0 // pred_fallthru
    _
  // Predicated region
  $region18: #{visual_transformer_forward.14} parent=0 // pred_check
    _
  $region19: #{visual_transformer_forward.14} parent=0 // pred_check_branch
    %189 = sbr.rel (0) target = $region21
  $region20: #{visual_transformer_forward.14} parent=0 // pred_region
    _
  $region21: #{visual_transformer_forward.14} parent=0 // pred_fallthru
    _

// kernel: visual_transformer_forward.13
$region0: #{visual_transformer_forward.13}
  #allocation0 [shape = 'u32[]', space=smem, size = 0x4, offset = 0x4, fixed_abs, tag = 'smem constant byte address 0x4 - core index']
  #allocation1 [shape = 'u32[72,128]{1,0:T(1,128)}', space=vmem, size = 0x9000, scoped, tag = 'internal scratch']
  %s0 = inlined_call_operand.vmem [shape: f32[32,48], index: 0, kind: input, shape index: {}]
  %s1 = inlined_call_operand.vmem [shape: bf16[48,32], index: 1, kind: input, shape index: {}]
  %s2 = inlined_call_operand.vmem [shape: f32[32,32], index: 2, kind: output, shape index: {}]
  %s3 = sld [smem:[#allocation0]]
  $region18: #{visual_transformer_forward.13} parent=0
    _
  %s5 = ssub.s32 1, %s3
  %s6 = scalar_select 0, %s5, %s3
  // Predicated region
  $region2: #{visual_transformer_forward.13} parent=0 // pred_check
    _
  $region3: #{visual_transformer_forward.13} parent=0 // pred_check_branch
    %8 = sbr.rel (0) target = $region5
  $region4: #{visual_transformer_forward.13} parent=0 // pred_region
    _
  $region5: #{visual_transformer_forward.13} parent=0 // pred_fallthru
    _
  // Predicated region
  $region6: #{visual_transformer_forward.13} parent=0 // pred_check
    _
  $region7: #{visual_transformer_forward.13} parent=0 // pred_check_branch
    %10 = sbr.rel (0) target = $region9
  $region8: #{visual_transformer_forward.13} parent=0 // pred_region
    _
  $region9: #{visual_transformer_forward.13} parent=0 // pred_fallthru
    _
  %v12 = vld [vmem:[%s0] sm:$0xff]
  %v13 = vld [vmem:[%s0 + $0x8] sm:$0xff]
  %v14 = vld [vmem:[%s0 + $0x10] sm:$0xff]
  %v15 = vld [vmem:[%s0 + $0x18] sm:$0xff]
  %v16 = vpack.c.bf16 %v13, %v12
  %v17 = vpack.c.bf16 %v15, %v14
  %v18 = vld [vmem:[%s1] sm:$0xf]
  %v19 = vld [vmem:[%s1 + $0x4] sm:$0xf]
  %v20 = vld [vmem:[%s1 + $0x8] sm:$0xf]
  %v21 = vld [vmem:[%s1 + $0xc] sm:$0xf]
  %v22 = vld [vmem:[%s1 + $0x10] sm:$0xf]
  %v23 = vld [vmem:[%s1 + $0x14] sm:$0xf]
  %v30 = vunpack.c.l.b16 %v18
  %v31 = vunpack.c.l.b16 %v19
  %v32 = vunpack.c.l.b16 %v20
  %v33 = vunpack.c.l.b16 %v21
  %v34 = vunpack.c.l.b16 %v22
  %v35 = vunpack.c.l.b16 %v23
  %v36 = vpack.c.b16 %v31, %v30
  %v37 = vpack.c.b16 %v33, %v32
  %v38 = vpack.c.b16 %v35, %v34
  %vm42 = vcmask 392192
  %v44 = vsel %vm42, %v16, 0
  %v47 = vsel %vm42, %v17, 0
  %49 = vmatpush.bf16.msra.mxu0 0
  %50 = vmatpush.bf16.msra.mxu0 0
  %51 = vmatpush.bf16.msra.mxu0 0
  %52 = vmatpush.bf16.msra.mxu0 0
  %53 = vmatpush.bf16.msra.mxu0 0
  %54 = vmatpush.bf16.msra.mxu0 %v38
  %55 = vmatpush.bf16.msra.mxu0 %v37
  %56 = vmatpush.bf16.msra.mxu0 %v36
  %57 = vmatmul.bf16.gmra.mxu0 %v44
  %v58 = vpop.f32.mrf.mxu0
  %v59 = vadd.f32 0.0, %v58
  %v60 = vpop.f32.mrf.mxu0
  %v61 = vadd.f32 0.0, %v60
  %62 = vmatmul.bf16.gmra.mxu0 %v47
  %v63 = vpop.f32.mrf.mxu0
  %v64 = vadd.f32 0.0, %v63
  %v65 = vpop.f32.mrf.mxu0
  %v66 = vadd.f32 0.0, %v65
  %67 = vdwg.mxu0
  %vm68 = vcmask 261120
  %69 = vst.msk [vmem:[%s2] sm:$0xff] %vm68, %v59
  %70 = vst.msk [vmem:[%s2 + $0x8] sm:$0xff] %vm68, %v61
  %71 = vst.msk [vmem:[%s2 + $0x10] sm:$0xff] %vm68, %v64
  %72 = vst.msk [vmem:[%s2 + $0x18] sm:$0xff] %vm68, %v66
  // Predicated region
  $region10: #{visual_transformer_forward.13} parent=0 // pred_check
    _
  $region11: #{visual_transformer_forward.13} parent=0 // pred_check_branch
    %74 = sbr.rel (0) target = $region13
  $region12: #{visual_transformer_forward.13} parent=0 // pred_region
    _
  $region13: #{visual_transformer_forward.13} parent=0 // pred_fallthru
    _
  // Predicated region
  $region14: #{visual_transformer_forward.13} parent=0 // pred_check
    _
  $region15: #{visual_transformer_forward.13} parent=0 // pred_check_branch
    %76 = sbr.rel (0) target = $region17
  $region16: #{visual_transformer_forward.13} parent=0 // pred_region
    _
  $region17: #{visual_transformer_forward.13} parent=0 // pred_fallthru
    _

// kernel: visual_transformer_forward.15
$region0: #{visual_transformer_forward.15}
  #allocation0 [shape = 'u32[]', space=smem, size = 0x4, offset = 0x4, fixed_abs, tag = 'smem constant byte address 0x4 - core index']
  #allocation1 [shape = 'u32[72,128]{1,0:T(1,128)}', space=vmem, size = 0x9000, scoped, tag = 'internal scratch']
  %s0 = inlined_call_operand.vmem [shape: f32[48,32], index: 0, kind: input, shape index: {}]
  %s1 = inlined_call_operand.vmem [shape: bf16[32,96], index: 1, kind: input, shape index: {}]
  %s2 = inlined_call_operand.vmem [shape: f32[1,32], index: 2, kind: input, shape index: {}]
  %s3 = inlined_call_operand.vmem [shape: f32[1,32], index: 3, kind: input, shape index: {}]
  %s4 = inlined_call_operand.vmem [shape: f32[1,96], index: 4, kind: input, shape index: {}]
  %s5 = inlined_call_operand.vmem [shape: bf16[48,96], index: 5, kind: output, shape index: {}]
  %s6 = sld [smem:[#allocation0]]
  $region30: #{visual_transformer_forward.15} parent=0
    _
  %s8 = ssub.s32 1, %s6
  %s9 = scalar_select 0, %s8, %s6
  // Predicated region
  $region2: #{visual_transformer_forward.15} parent=0 // pred_check
    _
  $region3: #{visual_transformer_forward.15} parent=0 // pred_check_branch
    %11 = sbr.rel (0) target = $region5
  $region4: #{visual_transformer_forward.15} parent=0 // pred_region
    _
  $region5: #{visual_transformer_forward.15} parent=0 // pred_fallthru
    _
  // Predicated region
  $region6: #{visual_transformer_forward.15} parent=0 // pred_check
    _
  $region7: #{visual_transformer_forward.15} parent=0 // pred_check_branch
    %13 = sbr.rel (0) target = $region9
  $region8: #{visual_transformer_forward.15} parent=0 // pred_region
    _
  $region9: #{visual_transformer_forward.15} parent=0 // pred_fallthru
    _
  // Predicated region
  $region10: #{visual_transformer_forward.15} parent=0 // pred_check
    _
  $region11: #{visual_transformer_forward.15} parent=0 // pred_check_branch
    %15 = sbr.rel (0) target = $region13
  $region12: #{visual_transformer_forward.15} parent=0 // pred_region
    _
  $region13: #{visual_transformer_forward.15} parent=0 // pred_fallthru
    _
  // Predicated region
  $region14: #{visual_transformer_forward.15} parent=0 // pred_check
    _
  $region15: #{visual_transformer_forward.15} parent=0 // pred_check_branch
    %17 = sbr.rel (0) target = $region17
  $region16: #{visual_transformer_forward.15} parent=0 // pred_region
    _
  $region17: #{visual_transformer_forward.15} parent=0 // pred_fallthru
    _
  // Predicated region
  $region18: #{visual_transformer_forward.15} parent=0 // pred_check
    _
  $region19: #{visual_transformer_forward.15} parent=0 // pred_check_branch
    %19 = sbr.rel (0) target = $region21
  $region20: #{visual_transformer_forward.15} parent=0 // pred_region
    _
  $region21: #{visual_transformer_forward.15} parent=0 // pred_fallthru
    _
  %v21 = vld [vmem:[%s0] sm:$0xff]
  %v22 = vld [vmem:[%s0 + $0x8] sm:$0xff]
  %v23 = vld [vmem:[%s0 + $0x10] sm:$0xff]
  %v24 = vld [vmem:[%s0 + $0x18] sm:$0xff]
  %v25 = vld [vmem:[%s0 + $0x20] sm:$0xff]
  %v26 = vld [vmem:[%s0 + $0x28] sm:$0xff]
  %vm27 = vcmask 261120
  %v28 = vsel %vm27, %v21, 0.0
  %29 = vadd.xlane.f32.xlu0 %v28
  %v30 = vpop.xlane.xlu0 %29
  %v31 = vsel %vm27, %v22, 0.0
  %32 = vadd.xlane.f32.xlu0 %v31
  %v33 = vpop.xlane.xlu0 %32
  %v34 = vsel %vm27, %v23, 0.0
  %35 = vadd.xlane.f32.xlu0 %v34
  %v36 = vpop.xlane.xlu0 %35
  %v37 = vsel %vm27, %v24, 0.0
  %38 = vadd.xlane.f32.xlu0 %v37
  %v39 = vpop.xlane.xlu0 %38
  %v40 = vsel %vm27, %v25, 0.0
  %41 = vadd.xlane.f32.xlu0 %v40
  %v42 = vpop.xlane.xlu0 %41
  %v43 = vsel %vm27, %v26, 0.0
  %44 = vadd.xlane.f32.xlu0 %v43
  %v45 = vpop.xlane.xlu0 %44
  %v46 = vrcp.pop 32.0
  %v47 = vmul.f32 32.0, %v46
  %v48 = vsub.f32 1.0, %v47
  %v49 = vmul.f32 %v46, %v48
  %v50 = vadd.f32 %v46, %v49
  %vm51 = vweird.f32 %v46
  %v52 = vsel %vm51, %v46, %v50
  %v53 = vmul.f32 %v30, %v52
  %v54 = vmul.f32 %v33, %v52
  %v55 = vmul.f32 %v36, %v52
  %v56 = vmul.f32 %v39, %v52
  %v57 = vmul.f32 %v42, %v52
  %v58 = vmul.f32 %v45, %v52
  %v59 = vsub.f32 %v21, %v53
  %v60 = vsub.f32 %v22, %v54
  %v61 = vsub.f32 %v23, %v55
  %v62 = vsub.f32 %v24, %v56
  %v63 = vsub.f32 %v25, %v57
  %v64 = vsub.f32 %v26, %v58
  %v65 = vmul.f32 %v59, %v59
  %v66 = vmul.f32 %v60, %v60
  %v67 = vmul.f32 %v61, %v61
  %v68 = vmul.f32 %v62, %v62
  %v69 = vmul.f32 %v63, %v63
  %v70 = vmul.f32 %v64, %v64
  %v71 = vsel %vm27, %v65, 0.0
  %72 = vadd.xlane.f32.xlu0 %v71
  %v73 = vpop.xlane.xlu0 %72
  %v74 = vsel %vm27, %v66, 0.0
  %75 = vadd.xlane.f32.xlu0 %v74
  %v76 = vpop.xlane.xlu0 %75
  %v77 = vsel %vm27, %v67, 0.0
  %78 = vadd.xlane.f32.xlu0 %v77
  %v79 = vpop.xlane.xlu0 %78
  %v80 = vsel %vm27, %v68, 0.0
  %81 = vadd.xlane.f32.xlu0 %v80
  %v82 = vpop.xlane.xlu0 %81
  %v83 = vsel %vm27, %v69, 0.0
  %84 = vadd.xlane.f32.xlu0 %v83
  %v85 = vpop.xlane.xlu0 %84
  %v86 = vsel %vm27, %v70, 0.0
  %87 = vadd.xlane.f32.xlu0 %v86
  %v88 = vpop.xlane.xlu0 %87
  %v89 = vmul.f32 %v73, %v52
  %v90 = vmul.f32 %v76, %v52
  %v91 = vmul.f32 %v79, %v52
  %v92 = vmul.f32 %v82, %v52
  %v93 = vmul.f32 %v85, %v52
  %v94 = vmul.f32 %v88, %v52
  %v95 = vadd.f32 %v89, 1e-07
  %v96 = vadd.f32 %v90, 1e-07
  %v97 = vadd.f32 %v91, 1e-07
  %v98 = vadd.f32 %v92, 1e-07
  %v99 = vadd.f32 %v93, 1e-07
  %v100 = vadd.f32 %v94, 1e-07
  %v101 = vrsqrt.pop %v95
  %v102 = vmul.f32 %v101, %v95
  %v103 = vmul.f32 %v102, %v101
  %v104 = vmul.f32 0.5, %v103
  %v105 = vsub.f32 1.5, %v104
  %v106 = vmul.f32 %v101, %v105
  %vm107 = vweird.f32 %v95
  %vm108 = vweird.f32 %v101
  %vm109 = vmor %vm107, %vm108
  %v110 = vsel %vm109, %v101, %v106
  %v111 = vrsqrt.pop %v96
  %v112 = vmul.f32 %v111, %v96
  %v113 = vmul.f32 %v112, %v111
  %v114 = vmul.f32 0.5, %v113
  %v115 = vsub.f32 1.5, %v114
  %v116 = vmul.f32 %v111, %v115
  %vm117 = vweird.f32 %v96
  %vm118 = vweird.f32 %v111
  %vm119 = vmor %vm117, %vm118
  %v120 = vsel %vm119, %v111, %v116
  %v121 = vrsqrt.pop %v97
  %v122 = vmul.f32 %v121, %v97
  %v123 = vmul.f32 %v122, %v121
  %v124 = vmul.f32 0.5, %v123
  %v125 = vsub.f32 1.5, %v124
  %v126 = vmul.f32 %v121, %v125
  %vm127 = vweird.f32 %v97
  %vm128 = vweird.f32 %v121
  %vm129 = vmor %vm127, %vm128
  %v130 = vsel %vm129, %v121, %v126
  %v131 = vrsqrt.pop %v98
  %v132 = vmul.f32 %v131, %v98
  %v133 = vmul.f32 %v132, %v131
  %v134 = vmul.f32 0.5, %v133
  %v135 = vsub.f32 1.5, %v134
  %v136 = vmul.f32 %v131, %v135
  %vm137 = vweird.f32 %v98
  %vm138 = vweird.f32 %v131
  %vm139 = vmor %vm137, %vm138
  %v140 = vsel %vm139, %v131, %v136
  %v141 = vrsqrt.pop %v99
  %v142 = vmul.f32 %v141, %v99
  %v143 = vmul.f32 %v142, %v141
  %v144 = vmul.f32 0.5, %v143
  %v145 = vsub.f32 1.5, %v144
  %v146 = vmul.f32 %v141, %v145
  %vm147 = vweird.f32 %v99
  %vm148 = vweird.f32 %v141
  %vm149 = vmor %vm147, %vm148
  %v150 = vsel %vm149, %v141, %v146
  %v151 = vrsqrt.pop %v100
  %v152 = vmul.f32 %v151, %v100
  %v153 = vmul.f32 %v152, %v151
  %v154 = vmul.f32 0.5, %v153
  %v155 = vsub.f32 1.5, %v154
  %v156 = vmul.f32 %v151, %v155
  %vm157 = vweird.f32 %v100
  %vm158 = vweird.f32 %v151
  %vm159 = vmor %vm157, %vm158
  %v160 = vsel %vm159, %v151, %v156
  %v161 = vmul.f32 %v59, %v110
  %v162 = vmul.f32 %v60, %v120
  %v163 = vmul.f32 %v61, %v130
  %v164 = vmul.f32 %v62, %v140
  %v165 = vmul.f32 %v63, %v150
  %v166 = vmul.f32 %v64, %v160
  %v167 = vld [vmem:[%s2] sm:$0x1]
  %v169 = vperm.slane %v167, 0
  %v171 = vmul.f32 %v161, %v169
  %v172 = vmul.f32 %v162, %v169
  %v173 = vmul.f32 %v163, %v169
  %v174 = vmul.f32 %v164, %v169
  %v175 = vmul.f32 %v165, %v169
  %v176 = vmul.f32 %v166, %v169
  %v177 = vld [vmem:[%s3] sm:$0x1]
  %v179 = vperm.slane %v177, 0
  %v181 = vadd.f32 %v171, %v179
  %v182 = vadd.f32 %v172, %v179
  %v183 = vadd.f32 %v173, %v179
  %v184 = vadd.f32 %v174, %v179
  %v185 = vadd.f32 %v175, %v179
  %v186 = vadd.f32 %v176, %v179
  %v187 = vpack.c.bf16 %v182, %v181
  %v188 = vpack.c.bf16 %v184, %v183
  %v189 = vpack.c.bf16 %v186, %v185
  %v190 = vld [vmem:[%s1] sm:$0xf]
  %v191 = vld [vmem:[%s1 + $0x4] sm:$0xf]
  %v192 = vld [vmem:[%s1 + $0x8] sm:$0xf]
  %v193 = vld [vmem:[%s1 + $0xc] sm:$0xf]
  %v194 = vld [vmem:[%s4] sm:$0x1]
  %v196 = vperm.slane %v194, 0
  %v202 = vunpack.c.l.b16 %v190
  %v203 = vunpack.c.l.b16 %v191
  %v204 = vunpack.c.l.b16 %v192
  %v205 = vunpack.c.l.b16 %v193
  %v206 = vpack.c.b16 %v203, %v202
  %v207 = vpack.c.b16 %v205, %v204
  %v211 = vsel %vm27, %v187, 0
  %v214 = vsel %vm27, %v188, 0
  %v217 = vsel %vm27, %v189, 0
  %219 = vmatpush.bf16.msra.mxu0 0
  %220 = vmatpush.bf16.msra.mxu0 0
  %221 = vmatpush.bf16.msra.mxu0 0
  %222 = vmatpush.bf16.msra.mxu0 0
  %223 = vmatpush.bf16.msra.mxu0 0
  %224 = vmatpush.bf16.msra.mxu0 0
  %225 = vmatpush.bf16.msra.mxu0 %v207
  %226 = vmatpush.bf16.msra.mxu0 %v206
  %227 = vmatmul.bf16.gmra.mxu0 %v211
  %v228 = vpop.f32.mrf.mxu0
  %v229 = vadd.f32 %v196, %v228
  %v230 = vpop.f32.mrf.mxu0
  %v231 = vadd.f32 %v196, %v230
  %232 = vmatmul.bf16.gmra.mxu0 %v214
  %v233 = vpop.f32.mrf.mxu0
  %v234 = vadd.f32 %v196, %v233
  %v235 = vpop.f32.mrf.mxu0
  %v236 = vadd.f32 %v196, %v235
  %237 = vmatmul.bf16.gmra.mxu0 %v217
  %v238 = vpop.f32.mrf.mxu0
  %v239 = vadd.f32 %v196, %v238
  %v240 = vpop.f32.mrf.mxu0
  %v241 = vadd.f32 %v196, %v240
  %242 = vdwg.mxu0
  %v243 = vpack.c.bf16 %v229, %v229
  %v244 = vpack.c.bf16 %v231, %v231
  %v245 = vpack.c.bf16 %v234, %v234
  %v246 = vpack.c.bf16 %v236, %v236
  %v247 = vpack.c.bf16 %v239, %v239
  %v248 = vpack.c.bf16 %v241, %v241
  %vm249 = vcmask 781312
  %250 = vst.msk [vmem:[%s5] sm:$0xf] %vm249, %v243
  %251 = vst.msk [vmem:[%s5 + $0x4] sm:$0xf] %vm249, %v244
  %252 = vst.msk [vmem:[%s5 + $0x8] sm:$0xf] %vm249, %v245
  %253 = vst.msk [vmem:[%s5 + $0xc] sm:$0xf] %vm249, %v246
  %254 = vst.msk [vmem:[%s5 + $0x10] sm:$0xf] %vm249, %v247
  %255 = vst.msk [vmem:[%s5 + $0x14] sm:$0xf] %vm249, %v248
  // Predicated region
  $region22: #{visual_transformer_forward.15} parent=0 // pred_check
    _
  $region23: #{visual_transformer_forward.15} parent=0 // pred_check_branch
    %257 = sbr.rel (0) target = $region25
  $region24: #{visual_transformer_forward.15} parent=0 // pred_region
    _
  $region25: #{visual_transformer_forward.15} parent=0 // pred_fallthru
    _
  // Predicated region
  $region26: #{visual_transformer_forward.15} parent=0 // pred_check
    _
  $region27: #{visual_transformer_forward.15} parent=0 // pred_check_branch
    %259 = sbr.rel (0) target = $region29
  $region28: #{visual_transformer_forward.15} parent=0 // pred_region
    _
  $region29: #{visual_transformer_forward.15} parent=0 // pred_fallthru
    _

// kernel: visual_transformer_forward.16
$region0: #{visual_transformer_forward.16}
  #allocation0 [shape = 'u32[]', space=smem, size = 0x4, offset = 0x4, fixed_abs, tag = 'smem constant byte address 0x4 - core index']
  #allocation1 [shape = 'u32[72,128]{1,0:T(1,128)}', space=vmem, size = 0x9000, scoped, tag = 'internal scratch']
  %s0 = inlined_call_operand.vmem [shape: bf16[2,24,96], index: 0, kind: input, shape index: {}]
  %s1 = inlined_call_operand.vmem [shape: bf16[2,24,32], index: 1, kind: output, shape index: {}]
  %s2 = sld [smem:[#allocation0]]
  $region37: #{visual_transformer_forward.16} parent=0
    _
  %s4 = ssub.s32 1, %s2
  %s5 = scalar_select 0, %s4, %s2
  loop: start=0, step=1, limit=4
  $region2: #{visual_transformer_forward.16} parent=0 // loop_pre_header
    _
  $region3: #{visual_transformer_forward.16} parent=0 // loop_header
    %s7 = sphi 0, %s11
    %p8 = scmp.ge.s32.totalorder %s7, 4
    %s17 = sphi 0, %s19
    %s20 = sphi 0, %s17
    %s21 = sphi 0, %s20
    %s37 = sphi 0, %s21
    %s43 = sphi 0, %s45
    %s46 = sphi 0, %s43
    %s47 = sphi 0, %s46
    %s63 = sphi 0, %s47
  $region4: #{visual_transformer_forward.16} parent=0 // loop_header_branch
    %10 = sbr.rel (%p8) target = $region8
  $region5: #{visual_transformer_forward.16} parent=0 // loop_body
    %s12 = ssub.s32 %s7, 1
    %s13 = ssub.s32 %s7, 2
    %s14 = sadd.s32 %s7, 1
    %s15 = ssub.s32 %s7, %s14
    %p16 = scmp.eq.s32.totalorder %s15, 0
    %s18 = sadd.s32 %s17, 1
    %s19 = scalar_select %p16, %s17, %s18
    %p22 = pneg %p16
    %p23 = scmp.eq.s32.totalorder %s7, 1
    %p24 = por %p22, %p23
    %p25 = scmp.ne.s32.totalorder %s17, %s20
    %p26 = scmp.eq.s32.totalorder %s7, 0
    %p27 = por %p25, %p26
    %p28 = scmp.ne.s32.totalorder %s17, %s20
    %p29 = scmp.eq.s32.totalorder %s12, 1
    %p30 = por %p28, %p29
    %p31 = scmp.ne.s32.totalorder %s20, %s21
    %p32 = scmp.eq.s32.totalorder %s12, 0
    %p33 = por %p31, %p32
    %p34 = scmp.ne.s32.totalorder %s20, %s21
    %p35 = scmp.eq.s32.totalorder %s13, 1
    %p36 = por %p34, %p35
    %p38 = scmp.ne.s32.totalorder %s21, %s37
    %p39 = scmp.eq.s32.totalorder %s13, 0
    %p40 = por %p38, %p39
    %s41 = ssub.s32 %s7, %s14
    %p42 = scmp.eq.s32.totalorder %s41, 0
    %s44 = sadd.s32 %s43, 1
    %s45 = scalar_select %p42, %s43, %s44
    %p48 = pneg %p42
    %p49 = scmp.eq.s32.totalorder %s7, 1
    %p50 = por %p48, %p49
    %p51 = scmp.ne.s32.totalorder %s43, %s46
    %p52 = scmp.eq.s32.totalorder %s7, 0
    %p53 = por %p51, %p52
    %p54 = scmp.ne.s32.totalorder %s43, %s46
    %p55 = scmp.eq.s32.totalorder %s12, 1
    %p56 = por %p54, %p55
    %p57 = scmp.ne.s32.totalorder %s46, %s47
    %p58 = scmp.eq.s32.totalorder %s12, 0
    %p59 = por %p57, %p58
    %p60 = scmp.ne.s32.totalorder %s46, %s47
    %p61 = scmp.eq.s32.totalorder %s13, 1
    %p62 = por %p60, %p61
    %p64 = scmp.ne.s32.totalorder %s47, %s63
    %p65 = scmp.eq.s32.totalorder %s13, 0
    %p66 = por %p64, %p65
    %p67 = scmp.le.s32.totalorder 1, %s7
    %p68 = scmp.lt.s32.totalorder %s7, 3
    %p69 = pnand %p67, %p68
    %p70 = pneg %p69
    // Predicated region
    $region9: #{visual_transformer_forward.16} parent=5 // pred_check
      _
    $region10: #{visual_transformer_forward.16} parent=5 // pred_check_branch
      %72 = sbr.rel (%p69) target = $region12
    $region11: #{visual_transformer_forward.16} parent=5 // pred_region
      %s73 = ssub.s32 %s7, 1
    $region12: #{visual_transformer_forward.16} parent=5 // pred_fallthru
      _
    %p74 = scmp.lt.s32.totalorder %s7, 2
    // Predicated region
    $region13: #{visual_transformer_forward.16} parent=5 // pred_check
      %p75 = pneg %p74
    $region14: #{visual_transformer_forward.16} parent=5 // pred_check_branch
      %77 = sbr.rel (%p75) target = $region16
    $region15: #{visual_transformer_forward.16} parent=5 // pred_region
      // Predicated region
      $region17: #{visual_transformer_forward.16} parent=15 // pred_check
        %p78 = pneg %p27
      $region18: #{visual_transformer_forward.16} parent=15 // pred_check_branch
        %80 = sbr.rel (%p78) target = $region20
      $region19: #{visual_transformer_forward.16} parent=15 // pred_region
        %p81 = scmp.lt.s32.totalorder %s7, 1
        %s82 = scalar_select %p81, %s7, 1
        %s83 = smul.addr %s82, 3
        %s84 = smul.addr %s83, 4
        %s85 = scalar_lea.vmem %s0, %s84
      $region20: #{visual_transformer_forward.16} parent=15 // pred_fallthru
        _
    $region16: #{visual_transformer_forward.16} parent=5 // pred_fallthru
      _
    %p86 = scmp.le.s32.totalorder 1, %s7
    %p87 = scmp.lt.s32.totalorder %s7, 3
    %p88 = pnand %p86, %p87
    %p89 = pneg %p88
    // Predicated region
    $region21: #{visual_transformer_forward.16} parent=5 // pred_check
      _
    $region22: #{visual_transformer_forward.16} parent=5 // pred_check_branch
      %91 = sbr.rel (%p88) target = $region24
    $region23: #{visual_transformer_forward.16} parent=5 // pred_region
      %s92 = ssub.s32 %s7, 1
      %p93 = scmp.lt.s32.totalorder %s12, 1
      %s94 = scalar_select %p93, %s12, 1
      %s95 = smul.addr %s94, 3
      %s96 = smul.addr %s95, 4
      %s97 = scalar_lea.vmem %s0, %s96
      %p98 = pneg %p33
      %p99 = pneg %p30
      %p100 = pneg %p59
      %p101 = pneg %p56
      %p102 = scmp.lt.s32.totalorder %s12, 1
      %s103 = scalar_select %p102, %s12, 1
      %s104 = smul.addr %s103, 3
      %s105 = smul.addr %s104, 4
      %s106 = scalar_lea.vmem %s1, %s105
      %p107 = scmp.lt.s32.totalorder %s12, 1
      %s108 = scalar_select %p107, %s12, 1
      %s109 = smul.addr %s108, 3
      %s110 = smul.addr %s109, 4
      %s111 = scalar_lea.vmem %s0, %s110
      %p112 = scmp.lt.s32.totalorder %s12, 1
      %s113 = scalar_select %p112, %s12, 1
      %s114 = smul.addr %s113, 3
      %s115 = smul.addr %s114, 4
      %s116 = scalar_lea.vmem %s1, %s115
      %v118 = vld [vmem:[%s111] sm:$0xf]
      %v119 = vld [vmem:[%s111 + $0x4] sm:$0xf]
      %v120 = vld [vmem:[%s111 + $0x8] sm:$0xf]
      %v121 = vlaneseq
      %v122 = vand.u32 %v121, 127
      %vm123 = vcmp.ge.s32.totalorder %v122, 17
      %v124 = vsel %vm123, -1e+30, 0.0
      %v128 = vunpack.c.l.b16 %v118
      %v129 = vunpack.c.l.b16 %v119
      %v130 = vunpack.c.l.b16 %v120
      %v131 = vpack.c.b16 %v129, %v128
      %v132 = vpack.c.b16 %v130, %v130
      %133 = vrot.lane.b32.xlu0 %v131, 96
      %v134 = vpop.permute.xlu0 %133
      %135 = vrot.lane.b32.xlu0 %v132, 96
      %v136 = vpop.permute.xlu0 %135
      %vm137 = vcmask 64512
      %v139 = vsel %vm137, %v131, 0
      %v142 = vsel %vm137, %v132, 0
      %v145 = vsel %vm137, %v134, 0
      %v148 = vsel %vm137, %v136, 0
      %150 = vmatpush.bf16.xpose.msra.mxu0 0
      %151 = vmatpush.bf16.xpose.msra.mxu0 0
      %152 = vmatpush.bf16.xpose.msra.mxu0 0
      %153 = vmatpush.bf16.xpose.msra.mxu0 0
      %154 = vmatpush.bf16.xpose.msra.mxu0 0
      %155 = vmatpush.bf16.xpose.msra.mxu0 0
      %156 = vmatpush.bf16.xpose.msra.mxu0 %v148
      %157 = vmatpush.bf16.xpose.msra.mxu0 %v145
      %158 = vmatmul.bf16.gmra.mxu0 %v139
      %v159 = vpop.f32.mrf.mxu0
      %v160 = vadd.f32 %v124, %v159
      %v161 = vpop.f32.mrf.mxu0
      %v162 = vadd.f32 %v124, %v161
      %163 = vmatmul.bf16.gmra.mxu0 %v142
      %v164 = vpop.f32.mrf.mxu0
      %v165 = vadd.f32 %v124, %v164
      %v166 = vpop.f32.mrf.mxu0
      %167 = vdwg.mxu0
      %vm168 = vcmask 195584
      %v169 = vsel %vm168, %v160, -inf
      %170 = vmax.xlane.f32.xlu0 %v169
      %v171 = vpop.xlane.xlu0 %170
      %v172 = vsel %vm168, %v162, -inf
      %173 = vmax.xlane.f32.xlu0 %v172
      %v174 = vpop.xlane.xlu0 %173
      %v175 = vsel %vm168, %v165, -inf
      %176 = vmax.xlane.f32.xlu0 %v175
      %v177 = vpop.xlane.xlu0 %176
      %v178 = vsub.f32 %v160, %v171
      %v179 = vsub.f32 %v162, %v174
      %v180 = vsub.f32 %v165, %v177
      %v181 = vmul.f32 %v178, 1.442695
      %v182 = vpow.pop %v181
      %v183 = vmul.f32 %v179, 1.442695
      %v184 = vpow.pop %v183
      %v185 = vmul.f32 %v180, 1.442695
      %v186 = vpow.pop %v185
      %v187 = vsel %vm168, %v182, 0.0
      %188 = vadd.xlane.f32.xlu0 %v187
      %v189 = vpop.xlane.xlu0 %188
      %v190 = vsel %vm168, %v184, 0.0
      %191 = vadd.xlane.f32.xlu0 %v190
      %v192 = vpop.xlane.xlu0 %191
      %v193 = vsel %vm168, %v186, 0.0
      %194 = vadd.xlane.f32.xlu0 %v193
      %v195 = vpop.xlane.xlu0 %194
      %v196 = vrcp.pop %v189
      %v197 = vrcp.pop %v192
      %v198 = vrcp.pop %v195
      %v199 = vmul.f32 %v182, %v196
      %v200 = vmul.f32 %v184, %v197
      %v201 = vmul.f32 %v186, %v198
      %v202 = vpack.c.bf16 %v200, %v199
      %v203 = vpack.c.bf16 %v201, %v201
      %204 = vrot.lane.b32.xlu0 %v131, 64
      %v205 = vpop.permute.xlu0 %204
      %206 = vrot.lane.b32.xlu0 %v132, 64
      %v207 = vpop.permute.xlu0 %206
      %v210 = vsel %vm168, %v202, 0
      %v213 = vsel %vm168, %v203, 0
      %vm215 = vcmask 1043456
      %v217 = vsel %vm215, %v207, 0
      %219 = vmatpush.bf16.msra.mxu0 0
      %220 = vmatpush.bf16.msra.mxu0 0
      %221 = vmatpush.bf16.msra.mxu0 0
      %222 = vmatpush.bf16.msra.mxu0 0
      %223 = vmatpush.bf16.msra.mxu0 0
      %224 = vmatpush.bf16.msra.mxu0 0
      %225 = vmatpush.bf16.msra.mxu0 %v217
      %226 = vmatpush.bf16.msra.mxu0 %v205
      %227 = vmatmul.bf16.gmra.mxu0 %v210
      %v228 = vpop.f32.mrf.mxu0
      %v229 = vadd.f32 0.0, %v228
      %v230 = vpop.f32.mrf.mxu0
      %v231 = vadd.f32 0.0, %v230
      %232 = vmatmul.bf16.gmra.mxu0 %v213
      %v233 = vpop.f32.mrf.mxu0
      %v234 = vadd.f32 0.0, %v233
      %v235 = vpop.f32.mrf.mxu0
      %236 = vdwg.mxu0
      %237 = vrot.lane.b32.xlu0 %v131, 120
      %v238 = vpop.permute.xlu0 %237
      %239 = vrot.lane.b32.xlu0 %v132, 120
      %v240 = vpop.permute.xlu0 %239
      %241 = vrot.lane.b32.xlu0 %v131, 88
      %v242 = vpop.permute.xlu0 %241
      %243 = vrot.lane.b32.xlu0 %v132, 88
      %v244 = vpop.permute.xlu0 %243
      %v246 = vsel %vm137, %v238, 0
      %v249 = vsel %vm137, %v240, 0
      %v252 = vsel %vm137, %v242, 0
      %v255 = vsel %vm137, %v244, 0
      %257 = vmatpush.bf16.xpose.msra.mxu0 0
      %258 = vmatpush.bf16.xpose.msra.mxu0 0
      %259 = vmatpush.bf16.xpose.msra.mxu0 0
      %260 = vmatpush.bf16.xpose.msra.mxu0 0
      %261 = vmatpush.bf16.xpose.msra.mxu0 0
      %262 = vmatpush.bf16.xpose.msra.mxu0 0
      %263 = vmatpush.bf16.xpose.msra.mxu0 %v255
      %264 = vmatpush.bf16.xpose.msra.mxu0 %v252
      %265 = vmatmul.bf16.gmra.mxu0 %v246
      %v266 = vpop.f32.mrf.mxu0
      %v267 = vadd.f32 %v124, %v266
      %v268 = vpop.f32.mrf.mxu0
      %v269 = vadd.f32 %v124, %v268
      %270 = vmatmul.bf16.gmra.mxu0 %v249
      %v271 = vpop.f32.mrf.mxu0
      %v272 = vadd.f32 %v124, %v271
      %v273 = vpop.f32.mrf.mxu0
      %274 = vdwg.mxu0
      %v275 = vsel %vm168, %v267, -inf
      %276 = vmax.xlane.f32.xlu0 %v275
      %v277 = vpop.xlane.xlu0 %276
      %v278 = vsel %vm168, %v269, -inf
      %279 = vmax.xlane.f32.xlu0 %v278
      %v280 = vpop.xlane.xlu0 %279
      %v281 = vsel %vm168, %v272, -inf
      %282 = vmax.xlane.f32.xlu0 %v281
      %v283 = vpop.xlane.xlu0 %282
      %v284 = vsub.f32 %v267, %v277
      %v285 = vsub.f32 %v269, %v280
      %v286 = vsub.f32 %v272, %v283
      %v287 = vmul.f32 %v284, 1.442695
      %v288 = vpow.pop %v287
      %v289 = vmul.f32 %v285, 1.442695
      %v290 = vpow.pop %v289
      %v291 = vmul.f32 %v286, 1.442695
      %v292 = vpow.pop %v291
      %v293 = vsel %vm168, %v288, 0.0
      %294 = vadd.xlane.f32.xlu0 %v293
      %v295 = vpop.xlane.xlu0 %294
      %v296 = vsel %vm168, %v290, 0.0
      %297 = vadd.xlane.f32.xlu0 %v296
      %v298 = vpop.xlane.xlu0 %297
      %v299 = vsel %vm168, %v292, 0.0
      %300 = vadd.xlane.f32.xlu0 %v299
      %v301 = vpop.xlane.xlu0 %300
      %v302 = vrcp.pop %v295
      %v303 = vrcp.pop %v298
      %v304 = vrcp.pop %v301
      %v305 = vmul.f32 %v288, %v302
      %v306 = vmul.f32 %v290, %v303
      %v307 = vmul.f32 %v292, %v304
      %v308 = vpack.c.bf16 %v306, %v305
      %v309 = vpack.c.bf16 %v307, %v307
      %310 = vrot.lane.b32.xlu0 %v131, 56
      %v311 = vpop.permute.xlu0 %310
      %312 = vrot.lane.b32.xlu0 %v132, 56
      %v313 = vpop.permute.xlu0 %312
      %v316 = vsel %vm168, %v308, 0
      %v319 = vsel %vm168, %v309, 0
      %v322 = vsel %vm215, %v313, 0
      %324 = vmatpush.bf16.msra.mxu0 0
      %325 = vmatpush.bf16.msra.mxu0 0
      %326 = vmatpush.bf16.msra.mxu0 0
      %327 = vmatpush.bf16.msra.mxu0 0
      %328 = vmatpush.bf16.msra.mxu0 0
      %329 = vmatpush.bf16.msra.mxu0 0
      %330 = vmatpush.bf16.msra.mxu0 %v322
      %331 = vmatpush.bf16.msra.mxu0 %v311
      %332 = vmatmul.bf16.gmra.mxu0 %v316
      %v333 = vpop.f32.mrf.mxu0
      %v334 = vadd.f32 0.0, %v333
      %v335 = vpop.f32.mrf.mxu0
      %v336 = vadd.f32 0.0, %v335
      %337 = vmatmul.bf16.gmra.mxu0 %v319
      %v338 = vpop.f32.mrf.mxu0
      %v339 = vadd.f32 0.0, %v338
      %v340 = vpop.f32.mrf.mxu0
      %341 = vdwg.mxu0
      %342 = vrot.lane.b32.xlu0 %v131, 112
      %v343 = vpop.permute.xlu0 %342
      %344 = vrot.lane.b32.xlu0 %v132, 112
      %v345 = vpop.permute.xlu0 %344
      %346 = vrot.lane.b32.xlu0 %v131, 80
      %v347 = vpop.permute.xlu0 %346
      %348 = vrot.lane.b32.xlu0 %v132, 80
      %v349 = vpop.permute.xlu0 %348
      %v351 = vsel %vm137, %v343, 0
      %v354 = vsel %vm137, %v345, 0
      %v357 = vsel %vm137, %v347, 0
      %v360 = vsel %vm137, %v349, 0
      %362 = vmatpush.bf16.xpose.msra.mxu0 0
      %363 = vmatpush.bf16.xpose.msra.mxu0 0
      %364 = vmatpush.bf16.xpose.msra.mxu0 0
      %365 = vmatpush.bf16.xpose.msra.mxu0 0
      %366 = vmatpush.bf16.xpose.msra.mxu0 0
      %367 = vmatpush.bf16.xpose.msra.mxu0 0
      %368 = vmatpush.bf16.xpose.msra.mxu0 %v360
      %369 = vmatpush.bf16.xpose.msra.mxu0 %v357
      %370 = vmatmul.bf16.gmra.mxu0 %v351
      %v371 = vpop.f32.mrf.mxu0
      %v372 = vadd.f32 %v124, %v371
      %v373 = vpop.f32.mrf.mxu0
      %v374 = vadd.f32 %v124, %v373
      %375 = vmatmul.bf16.gmra.mxu0 %v354
      %v376 = vpop.f32.mrf.mxu0
      %v377 = vadd.f32 %v124, %v376
      %v378 = vpop.f32.mrf.mxu0
      %379 = vdwg.mxu0
      %v380 = vsel %vm168, %v372, -inf
      %381 = vmax.xlane.f32.xlu0 %v380
      %v382 = vpop.xlane.xlu0 %381
      %v383 = vsel %vm168, %v374, -inf
      %384 = vmax.xlane.f32.xlu0 %v383
      %v385 = vpop.xlane.xlu0 %384
      %v386 = vsel %vm168, %v377, -inf
      %387 = vmax.xlane.f32.xlu0 %v386
      %v388 = vpop.xlane.xlu0 %387
      %v389 = vsub.f32 %v372, %v382
      %v390 = vsub.f32 %v374, %v385
      %v391 = vsub.f32 %v377, %v388
      %v392 = vmul.f32 %v389, 1.442695
      %v393 = vpow.pop %v392
      %v394 = vmul.f32 %v390, 1.442695
      %v395 = vpow.pop %v394
      %v396 = vmul.f32 %v391, 1.442695
      %v397 = vpow.pop %v396
      %v398 = vsel %vm168, %v393, 0.0
      %399 = vadd.xlane.f32.xlu0 %v398
      %v400 = vpop.xlane.xlu0 %399
      %v401 = vsel %vm168, %v395, 0.0
      %402 = vadd.xlane.f32.xlu0 %v401
      %v403 = vpop.xlane.xlu0 %402
      %v404 = vsel %vm168, %v397, 0.0
      %405 = vadd.xlane.f32.xlu0 %v404
      %v406 = vpop.xlane.xlu0 %405
      %v407 = vrcp.pop %v400
      %v408 = vrcp.pop %v403
      %v409 = vrcp.pop %v406
      %v410 = vmul.f32 %v393, %v407
      %v411 = vmul.f32 %v395, %v408
      %v412 = vmul.f32 %v397, %v409
      %v413 = vpack.c.bf16 %v411, %v410
      %v414 = vpack.c.bf16 %v412, %v412
      %415 = vrot.lane.b32.xlu0 %v131, 48
      %v416 = vpop.permute.xlu0 %415
      %417 = vrot.lane.b32.xlu0 %v132, 48
      %v418 = vpop.permute.xlu0 %417
      %v421 = vsel %vm168, %v413, 0
      %v424 = vsel %vm168, %v414, 0
      %v427 = vsel %vm215, %v418, 0
      %429 = vmatpush.bf16.msra.mxu0 0
      %430 = vmatpush.bf16.msra.mxu0 0
      %431 = vmatpush.bf16.msra.mxu0 0
      %432 = vmatpush.bf16.msra.mxu0 0
      %433 = vmatpush.bf16.msra.mxu0 0
      %434 = vmatpush.bf16.msra.mxu0 0
      %435 = vmatpush.bf16.msra.mxu0 %v427
      %436 = vmatpush.bf16.msra.mxu0 %v416
      %437 = vmatmul.bf16.gmra.mxu0 %v421
      %v438 = vpop.f32.mrf.mxu0
      %v439 = vadd.f32 0.0, %v438
      %v440 = vpop.f32.mrf.mxu0
      %v441 = vadd.f32 0.0, %v440
      %442 = vmatmul.bf16.gmra.mxu0 %v424
      %v443 = vpop.f32.mrf.mxu0
      %v444 = vadd.f32 0.0, %v443
      %v445 = vpop.f32.mrf.mxu0
      %446 = vdwg.mxu0
      %447 = vrot.lane.b32.xlu0 %v131, 104
      %v448 = vpop.permute.xlu0 %447
      %449 = vrot.lane.b32.xlu0 %v132, 104
      %v450 = vpop.permute.xlu0 %449
      %451 = vrot.lane.b32.xlu0 %v131, 72
      %v452 = vpop.permute.xlu0 %451
      %453 = vrot.lane.b32.xlu0 %v132, 72
      %v454 = vpop.permute.xlu0 %453
      %v456 = vsel %vm137, %v448, 0
      %v459 = vsel %vm137, %v450, 0
      %v462 = vsel %vm137, %v452, 0
      %v465 = vsel %vm137, %v454, 0
      %467 = vmatpush.bf16.xpose.msra.mxu0 0
      %468 = vmatpush.bf16.xpose.msra.mxu0 0
      %469 = vmatpush.bf16.xpose.msra.mxu0 0
      %470 = vmatpush.bf16.xpose.msra.mxu0 0
      %471 = vmatpush.bf16.xpose.msra.mxu0 0
      %472 = vmatpush.bf16.xpose.msra.mxu0 0
      %473 = vmatpush.bf16.xpose.msra.mxu0 %v465
      %474 = vmatpush.bf16.xpose.msra.mxu0 %v462
      %475 = vmatmul.bf16.gmra.mxu0 %v456
      %v476 = vpop.f32.mrf.mxu0
      %v477 = vadd.f32 %v124, %v476
      %v478 = vpop.f32.mrf.mxu0
      %v479 = vadd.f32 %v124, %v478
      %480 = vmatmul.bf16.gmra.mxu0 %v459
      %v481 = vpop.f32.mrf.mxu0
      %v482 = vadd.f32 %v124, %v481
      %v483 = vpop.f32.mrf.mxu0
      %484 = vdwg.mxu0
      %v485 = vsel %vm168, %v477, -inf
      %486 = vmax.xlane.f32.xlu0 %v485
      %v487 = vpop.xlane.xlu0 %486
      %v488 = vsel %vm168, %v479, -inf
      %489 = vmax.xlane.f32.xlu0 %v488
      %v490 = vpop.xlane.xlu0 %489
      %v491 = vsel %vm168, %v482, -inf
      %492 = vmax.xlane.f32.xlu0 %v491
      %v493 = vpop.xlane.xlu0 %492
      %v494 = vsub.f32 %v477, %v487
      %v495 = vsub.f32 %v479, %v490
      %v496 = vsub.f32 %v482, %v493
      %v497 = vmul.f32 %v494, 1.442695
      %v498 = vpow.pop %v497
      %v499 = vmul.f32 %v495, 1.442695
      %v500 = vpow.pop %v499
      %v501 = vmul.f32 %v496, 1.442695
      %v502 = vpow.pop %v501
      %v503 = vsel %vm168, %v498, 0.0
      %504 = vadd.xlane.f32.xlu0 %v503
      %v505 = vpop.xlane.xlu0 %504
      %v506 = vsel %vm168, %v500, 0.0
      %507 = vadd.xlane.f32.xlu0 %v506
      %v508 = vpop.xlane.xlu0 %507
      %v509 = vsel %vm168, %v502, 0.0
      %510 = vadd.xlane.f32.xlu0 %v509
      %v511 = vpop.xlane.xlu0 %510
      %v512 = vrcp.pop %v505
      %v513 = vrcp.pop %v508
      %v514 = vrcp.pop %v511
      %v515 = vmul.f32 %v498, %v512
      %v516 = vmul.f32 %v500, %v513
      %v517 = vmul.f32 %v502, %v514
      %v518 = vpack.c.bf16 %v516, %v515
      %v519 = vpack.c.bf16 %v517, %v517
      %520 = vrot.lane.b32.xlu0 %v131, 40
      %v521 = vpop.permute.xlu0 %520
      %522 = vrot.lane.b32.xlu0 %v132, 40
      %v523 = vpop.permute.xlu0 %522
      %v526 = vsel %vm168, %v518, 0
      %v529 = vsel %vm168, %v519, 0
      %v532 = vsel %vm215, %v523, 0
      %534 = vmatpush.bf16.msra.mxu0 0
      %535 = vmatpush.bf16.msra.mxu0 0
      %536 = vmatpush.bf16.msra.mxu0 0
      %537 = vmatpush.bf16.msra.mxu0 0
      %538 = vmatpush.bf16.msra.mxu0 0
      %539 = vmatpush.bf16.msra.mxu0 0
      %540 = vmatpush.bf16.msra.mxu0 %v532
      %541 = vmatpush.bf16.msra.mxu0 %v521
      %542 = vmatmul.bf16.gmra.mxu0 %v526
      %v543 = vpop.f32.mrf.mxu0
      %v544 = vadd.f32 0.0, %v543
      %v545 = vpop.f32.mrf.mxu0
      %v546 = vadd.f32 0.0, %v545
      %547 = vmatmul.bf16.gmra.mxu0 %v529
      %v548 = vpop.f32.mrf.mxu0
      %v549 = vadd.f32 0.0, %v548
      %v550 = vpop.f32.mrf.mxu0
      %551 = vdwg.mxu0
      %555 = vrot.lane.b32.xlu0 %v334, 8
      %v556 = vpop.permute.xlu0 %555
      %557 = vrot.lane.b32.xlu0 %v336, 8
      %v558 = vpop.permute.xlu0 %557
      %559 = vrot.lane.b32.xlu0 %v339, 8
      %v560 = vpop.permute.xlu0 %559
      %567 = vrot.lane.b32.xlu0 %v439, 16
      %v568 = vpop.permute.xlu0 %567
      %569 = vrot.lane.b32.xlu0 %v441, 16
      %v570 = vpop.permute.xlu0 %569
      %571 = vrot.lane.b32.xlu0 %v444, 16
      %v572 = vpop.permute.xlu0 %571
      %579 = vrot.lane.b32.xlu0 %v544, 24
      %v580 = vpop.permute.xlu0 %579
      %581 = vrot.lane.b32.xlu0 %v546, 24
      %v582 = vpop.permute.xlu0 %581
      %583 = vrot.lane.b32.xlu0 %v549, 24
      %v584 = vpop.permute.xlu0 %583
      %v588 = vsel %vm137, %v229, %v556
      %v589 = vsel %vm137, %v231, %v558
      %v590 = vsel %vm137, %v234, %v560
      %vm591 = vcmask 130048
      %v592 = vsel %vm591, %v588, %v568
      %v593 = vsel %vm591, %v589, %v570
      %v594 = vsel %vm591, %v590, %v572
      %v595 = vsel %vm168, %v592, %v580
      %v596 = vsel %vm168, %v593, %v582
      %v597 = vsel %vm168, %v594, %v584
      %v598 = vpack.c.bf16 %v595, %v595
      %v599 = vpack.c.bf16 %v596, %v596
      %v600 = vpack.c.bf16 %v597, %v597
      %vm601 = vcmask 257024
      %602 = vst.msk [vmem:[%s116] sm:$0xf] %vm601, %v598
      %603 = vst.msk [vmem:[%s116 + $0x4] sm:$0xf] %vm601, %v599
      %604 = vst.msk [vmem:[%s116 + $0x8] sm:$0xf] %vm601, %v600
      %p605 = scmp.lt.s32.totalorder %s12, 1
      %s606 = scalar_select %p605, %s12, 1
      %s607 = smul.addr %s606, 3
      %s608 = smul.addr %s607, 4
      %s609 = scalar_lea.vmem %s1, %s608
      // Predicated region
      $region25: #{visual_transformer_forward.16} parent=23 // pred_check
        %p610 = pneg %p56
      $region26: #{visual_transformer_forward.16} parent=23 // pred_check_branch
        %612 = sbr.rel (%p610) target = $region28
      $region27: #{visual_transformer_forward.16} parent=23 // pred_region
        _
      $region28: #{visual_transformer_forward.16} parent=23 // pred_fallthru
        _
    $region24: #{visual_transformer_forward.16} parent=5 // pred_fallthru
      _
    %p613 = scmp.le.s32.totalorder 2, %s7
    // Predicated region
    $region29: #{visual_transformer_forward.16} parent=5 // pred_check
      %p614 = pneg %p613
    $region30: #{visual_transformer_forward.16} parent=5 // pred_check_branch
      %616 = sbr.rel (%p614) target = $region32
    $region31: #{visual_transformer_forward.16} parent=5 // pred_region
      %s617 = ssub.s32 %s7, 2
      // Predicated region
      $region33: #{visual_transformer_forward.16} parent=31 // pred_check
        %p618 = pneg %p62
      $region34: #{visual_transformer_forward.16} parent=31 // pred_check_branch
        %620 = sbr.rel (%p618) target = $region36
      $region35: #{visual_transformer_forward.16} parent=31 // pred_region
        %p621 = scmp.lt.s32.totalorder %s13, 1
        %s622 = scalar_select %p621, %s13, 1
        %s623 = smul.addr %s622, 3
        %s624 = smul.addr %s623, 4
        %s625 = scalar_lea.vmem %s1, %s624
      $region36: #{visual_transformer_forward.16} parent=31 // pred_fallthru
        _
    $region32: #{visual_transformer_forward.16} parent=5 // pred_fallthru
      _
  $region6: #{visual_transformer_forward.16} parent=0 // loop_footer
    %s11 = sadd.s32 1, %s7
  $region7: #{visual_transformer_forward.16} parent=0 // loop_footer_branch
    %6 = sbr.rel target = $region3
  $region8: #{visual_transformer_forward.16} parent=0 // loop_exit
    _

// kernel: visual_transformer_forward.17
$region0: #{visual_transformer_forward.17}
  #allocation0 [shape = 'u32[]', space=smem, size = 0x4, offset = 0x4, fixed_abs, tag = 'smem constant byte address 0x4 - core index']
  #allocation1 [shape = 'u32[72,128]{1,0:T(1,128)}', space=vmem, size = 0x9000, scoped, tag = 'internal scratch']
  %s0 = inlined_call_operand.vmem [shape: bf16[48,32], index: 0, kind: input, shape index: {}]
  %s1 = inlined_call_operand.vmem [shape: bf16[32,32], index: 1, kind: input, shape index: {}]
  %s2 = inlined_call_operand.vmem [shape: f32[1,32], index: 2, kind: input, shape index: {}]
  %s3 = inlined_call_operand.vmem [shape: f32[48,32], index: 3, kind: input, shape index: {}]
  %s4 = inlined_call_operand.vmem [shape: f32[48,32], index: 4, kind: output, shape index: {}]
  %s5 = sld [smem:[#allocation0]]
  $region26: #{visual_transformer_forward.17} parent=0
    _
  %s7 = ssub.s32 1, %s5
  %s8 = scalar_select 0, %s7, %s5
  // Predicated region
  $region2: #{visual_transformer_forward.17} parent=0 // pred_check
    _
  $region3: #{visual_transformer_forward.17} parent=0 // pred_check_branch
    %10 = sbr.rel (0) target = $region5
  $region4: #{visual_transformer_forward.17} parent=0 // pred_region
    _
  $region5: #{visual_transformer_forward.17} parent=0 // pred_fallthru
    _
  // Predicated region
  $region6: #{visual_transformer_forward.17} parent=0 // pred_check
    _
  $region7: #{visual_transformer_forward.17} parent=0 // pred_check_branch
    %12 = sbr.rel (0) target = $region9
  $region8: #{visual_transformer_forward.17} parent=0 // pred_region
    _
  $region9: #{visual_transformer_forward.17} parent=0 // pred_fallthru
    _
  // Predicated region
  $region10: #{visual_transformer_forward.17} parent=0 // pred_check
    _
  $region11: #{visual_transformer_forward.17} parent=0 // pred_check_branch
    %14 = sbr.rel (0) target = $region13
  $region12: #{visual_transformer_forward.17} parent=0 // pred_region
    _
  $region13: #{visual_transformer_forward.17} parent=0 // pred_fallthru
    _
  // Predicated region
  $region14: #{visual_transformer_forward.17} parent=0 // pred_check
    _
  $region15: #{visual_transformer_forward.17} parent=0 // pred_check_branch
    %16 = sbr.rel (0) target = $region17
  $region16: #{visual_transformer_forward.17} parent=0 // pred_region
    _
  $region17: #{visual_transformer_forward.17} parent=0 // pred_fallthru
    _
  %v18 = vld [vmem:[%s0] sm:$0xf]
  %v19 = vld [vmem:[%s0 + $0x4] sm:$0xf]
  %v20 = vld [vmem:[%s0 + $0x8] sm:$0xf]
  %v21 = vld [vmem:[%s0 + $0xc] sm:$0xf]
  %v22 = vld [vmem:[%s0 + $0x10] sm:$0xf]
  %v23 = vld [vmem:[%s0 + $0x14] sm:$0xf]
  %v24 = vld [vmem:[%s1] sm:$0xf]
  %v25 = vld [vmem:[%s1 + $0x4] sm:$0xf]
  %v26 = vld [vmem:[%s1 + $0x8] sm:$0xf]
  %v27 = vld [vmem:[%s1 + $0xc] sm:$0xf]
  %v28 = vld [vmem:[%s2] sm:$0x1]
  %v30 = vperm.slane %v28, 0
  %v38 = vunpack.c.l.b16 %v18
  %v39 = vunpack.c.l.b16 %v19
  %v40 = vunpack.c.l.b16 %v20
  %v41 = vunpack.c.l.b16 %v21
  %v42 = vunpack.c.l.b16 %v22
  %v43 = vunpack.c.l.b16 %v23
  %v44 = vpack.c.b16 %v39, %v38
  %v45 = vpack.c.b16 %v41, %v40
  %v46 = vpack.c.b16 %v43, %v42
  %v51 = vunpack.c.l.b16 %v24
  %v52 = vunpack.c.l.b16 %v25
  %v53 = vunpack.c.l.b16 %v26
  %v54 = vunpack.c.l.b16 %v27
  %v55 = vpack.c.b16 %v52, %v51
  %v56 = vpack.c.b16 %v54, %v53
  %vm59 = vcmask 261120
  %v61 = vsel %vm59, %v44, 0
  %v64 = vsel %vm59, %v45, 0
  %v67 = vsel %vm59, %v46, 0
  %69 = vmatpush.bf16.msra.mxu0 0
  %70 = vmatpush.bf16.msra.mxu0 0
  %71 = vmatpush.bf16.msra.mxu0 0
  %72 = vmatpush.bf16.msra.mxu0 0
  %73 = vmatpush.bf16.msra.mxu0 0
  %74 = vmatpush.bf16.msra.mxu0 0
  %75 = vmatpush.bf16.msra.mxu0 %v56
  %76 = vmatpush.bf16.msra.mxu0 %v55
  %77 = vmatmul.bf16.gmra.mxu0 %v61
  %v78 = vpop.f32.mrf.mxu0
  %v79 = vadd.f32 %v30, %v78
  %v80 = vpop.f32.mrf.mxu0
  %v81 = vadd.f32 %v30, %v80
  %82 = vmatmul.bf16.gmra.mxu0 %v64
  %v83 = vpop.f32.mrf.mxu0
  %v84 = vadd.f32 %v30, %v83
  %v85 = vpop.f32.mrf.mxu0
  %v86 = vadd.f32 %v30, %v85
  %87 = vmatmul.bf16.gmra.mxu0 %v67
  %v88 = vpop.f32.mrf.mxu0
  %v89 = vadd.f32 %v30, %v88
  %v90 = vpop.f32.mrf.mxu0
  %v91 = vadd.f32 %v30, %v90
  %92 = vdwg.mxu0
  %v93 = vld [vmem:[%s3] sm:$0xff]
  %v94 = vld [vmem:[%s3 + $0x8] sm:$0xff]
  %v95 = vld [vmem:[%s3 + $0x10] sm:$0xff]
  %v96 = vld [vmem:[%s3 + $0x18] sm:$0xff]
  %v97 = vld [vmem:[%s3 + $0x20] sm:$0xff]
  %v98 = vld [vmem:[%s3 + $0x28] sm:$0xff]
  %v99 = vadd.f32 %v79, %v93
  %v100 = vadd.f32 %v81, %v94
  %v101 = vadd.f32 %v84, %v95
  %v102 = vadd.f32 %v86, %v96
  %v103 = vadd.f32 %v89, %v97
  %v104 = vadd.f32 %v91, %v98
  %105 = vst.msk [vmem:[%s4] sm:$0xff] %vm59, %v99
  %106 = vst.msk [vmem:[%s4 + $0x8] sm:$0xff] %vm59, %v100
  %107 = vst.msk [vmem:[%s4 + $0x10] sm:$0xff] %vm59, %v101
  %108 = vst.msk [vmem:[%s4 + $0x18] sm:$0xff] %vm59, %v102
  %109 = vst.msk [vmem:[%s4 + $0x20] sm:$0xff] %vm59, %v103
  %110 = vst.msk [vmem:[%s4 + $0x28] sm:$0xff] %vm59, %v104
  // Predicated region
  $region18: #{visual_transformer_forward.17} parent=0 // pred_check
    _
  $region19: #{visual_transformer_forward.17} parent=0 // pred_check_branch
    %112 = sbr.rel (0) target = $region21
  $region20: #{visual_transformer_forward.17} parent=0 // pred_region
    _
  $region21: #{visual_transformer_forward.17} parent=0 // pred_fallthru
    _
  // Predicated region
  $region22: #{visual_transformer_forward.17} parent=0 // pred_check
    _
  $region23: #{visual_transformer_forward.17} parent=0 // pred_check_branch
    %114 = sbr.rel (0) target = $region25
  $region24: #{visual_transformer_forward.17} parent=0 // pred_region
    _
  $region25: #{visual_transformer_forward.17} parent=0 // pred_fallthru
    _

// kernel: visual_transformer_forward.18
$region0: #{visual_transformer_forward.18}
  #allocation0 [shape = 'u32[]', space=smem, size = 0x4, offset = 0x4, fixed_abs, tag = 'smem constant byte address 0x4 - core index']
  #allocation1 [shape = 'u32[72,128]{1,0:T(1,128)}', space=vmem, size = 0x9000, scoped, tag = 'internal scratch']
  %s0 = inlined_call_operand.vmem [shape: f32[48,32], index: 0, kind: input, shape index: {}]
  %s1 = inlined_call_operand.vmem [shape: bf16[32,128], index: 1, kind: input, shape index: {}]
  %s2 = inlined_call_operand.vmem [shape: f32[1,32], index: 2, kind: input, shape index: {}]
  %s3 = inlined_call_operand.vmem [shape: f32[1,32], index: 3, kind: input, shape index: {}]
  %s4 = inlined_call_operand.vmem [shape: f32[1,128], index: 4, kind: input, shape index: {}]
  %s5 = inlined_call_operand.vmem [shape: bf16[48,128], index: 5, kind: output, shape index: {}]
  %s6 = sld [smem:[#allocation0]]
  $region30: #{visual_transformer_forward.18} parent=0
    _
  %s8 = ssub.s32 1, %s6
  %s9 = scalar_select 0, %s8, %s6
  // Predicated region
  $region2: #{visual_transformer_forward.18} parent=0 // pred_check
    _
  $region3: #{visual_transformer_forward.18} parent=0 // pred_check_branch
    %11 = sbr.rel (0) target = $region5
  $region4: #{visual_transformer_forward.18} parent=0 // pred_region
    _
  $region5: #{visual_transformer_forward.18} parent=0 // pred_fallthru
    _
  // Predicated region
  $region6: #{visual_transformer_forward.18} parent=0 // pred_check
    _
  $region7: #{visual_transformer_forward.18} parent=0 // pred_check_branch
    %13 = sbr.rel (0) target = $region9
  $region8: #{visual_transformer_forward.18} parent=0 // pred_region
    _
  $region9: #{visual_transformer_forward.18} parent=0 // pred_fallthru
    _
  // Predicated region
  $region10: #{visual_transformer_forward.18} parent=0 // pred_check
    _
  $region11: #{visual_transformer_forward.18} parent=0 // pred_check_branch
    %15 = sbr.rel (0) target = $region13
  $region12: #{visual_transformer_forward.18} parent=0 // pred_region
    _
  $region13: #{visual_transformer_forward.18} parent=0 // pred_fallthru
    _
  // Predicated region
  $region14: #{visual_transformer_forward.18} parent=0 // pred_check
    _
  $region15: #{visual_transformer_forward.18} parent=0 // pred_check_branch
    %17 = sbr.rel (0) target = $region17
  $region16: #{visual_transformer_forward.18} parent=0 // pred_region
    _
  $region17: #{visual_transformer_forward.18} parent=0 // pred_fallthru
    _
  // Predicated region
  $region18: #{visual_transformer_forward.18} parent=0 // pred_check
    _
  $region19: #{visual_transformer_forward.18} parent=0 // pred_check_branch
    %19 = sbr.rel (0) target = $region21
  $region20: #{visual_transformer_forward.18} parent=0 // pred_region
    _
  $region21: #{visual_transformer_forward.18} parent=0 // pred_fallthru
    _
  %v21 = vld [vmem:[%s0] sm:$0xff]
  %v22 = vld [vmem:[%s0 + $0x8] sm:$0xff]
  %v23 = vld [vmem:[%s0 + $0x10] sm:$0xff]
  %v24 = vld [vmem:[%s0 + $0x18] sm:$0xff]
  %v25 = vld [vmem:[%s0 + $0x20] sm:$0xff]
  %v26 = vld [vmem:[%s0 + $0x28] sm:$0xff]
  %vm27 = vcmask 261120
  %v28 = vsel %vm27, %v21, 0.0
  %29 = vadd.xlane.f32.xlu0 %v28
  %v30 = vpop.xlane.xlu0 %29
  %v31 = vsel %vm27, %v22, 0.0
  %32 = vadd.xlane.f32.xlu0 %v31
  %v33 = vpop.xlane.xlu0 %32
  %v34 = vsel %vm27, %v23, 0.0
  %35 = vadd.xlane.f32.xlu0 %v34
  %v36 = vpop.xlane.xlu0 %35
  %v37 = vsel %vm27, %v24, 0.0
  %38 = vadd.xlane.f32.xlu0 %v37
  %v39 = vpop.xlane.xlu0 %38
  %v40 = vsel %vm27, %v25, 0.0
  %41 = vadd.xlane.f32.xlu0 %v40
  %v42 = vpop.xlane.xlu0 %41
  %v43 = vsel %vm27, %v26, 0.0
  %44 = vadd.xlane.f32.xlu0 %v43
  %v45 = vpop.xlane.xlu0 %44
  %v46 = vrcp.pop 32.0
  %v47 = vmul.f32 32.0, %v46
  %v48 = vsub.f32 1.0, %v47
  %v49 = vmul.f32 %v46, %v48
  %v50 = vadd.f32 %v46, %v49
  %vm51 = vweird.f32 %v46
  %v52 = vsel %vm51, %v46, %v50
  %v53 = vmul.f32 %v30, %v52
  %v54 = vmul.f32 %v33, %v52
  %v55 = vmul.f32 %v36, %v52
  %v56 = vmul.f32 %v39, %v52
  %v57 = vmul.f32 %v42, %v52
  %v58 = vmul.f32 %v45, %v52
  %v59 = vsub.f32 %v21, %v53
  %v60 = vsub.f32 %v22, %v54
  %v61 = vsub.f32 %v23, %v55
  %v62 = vsub.f32 %v24, %v56
  %v63 = vsub.f32 %v25, %v57
  %v64 = vsub.f32 %v26, %v58
  %v65 = vmul.f32 %v59, %v59
  %v66 = vmul.f32 %v60, %v60
  %v67 = vmul.f32 %v61, %v61
  %v68 = vmul.f32 %v62, %v62
  %v69 = vmul.f32 %v63, %v63
  %v70 = vmul.f32 %v64, %v64
  %v71 = vsel %vm27, %v65, 0.0
  %72 = vadd.xlane.f32.xlu0 %v71
  %v73 = vpop.xlane.xlu0 %72
  %v74 = vsel %vm27, %v66, 0.0
  %75 = vadd.xlane.f32.xlu0 %v74
  %v76 = vpop.xlane.xlu0 %75
  %v77 = vsel %vm27, %v67, 0.0
  %78 = vadd.xlane.f32.xlu0 %v77
  %v79 = vpop.xlane.xlu0 %78
  %v80 = vsel %vm27, %v68, 0.0
  %81 = vadd.xlane.f32.xlu0 %v80
  %v82 = vpop.xlane.xlu0 %81
  %v83 = vsel %vm27, %v69, 0.0
  %84 = vadd.xlane.f32.xlu0 %v83
  %v85 = vpop.xlane.xlu0 %84
  %v86 = vsel %vm27, %v70, 0.0
  %87 = vadd.xlane.f32.xlu0 %v86
  %v88 = vpop.xlane.xlu0 %87
  %v89 = vmul.f32 %v73, %v52
  %v90 = vmul.f32 %v76, %v52
  %v91 = vmul.f32 %v79, %v52
  %v92 = vmul.f32 %v82, %v52
  %v93 = vmul.f32 %v85, %v52
  %v94 = vmul.f32 %v88, %v52
  %v95 = vadd.f32 %v89, 1e-07
  %v96 = vadd.f32 %v90, 1e-07
  %v97 = vadd.f32 %v91, 1e-07
  %v98 = vadd.f32 %v92, 1e-07
  %v99 = vadd.f32 %v93, 1e-07
  %v100 = vadd.f32 %v94, 1e-07
  %v101 = vrsqrt.pop %v95
  %v102 = vmul.f32 %v101, %v95
  %v103 = vmul.f32 %v102, %v101
  %v104 = vmul.f32 0.5, %v103
  %v105 = vsub.f32 1.5, %v104
  %v106 = vmul.f32 %v101, %v105
  %vm107 = vweird.f32 %v95
  %vm108 = vweird.f32 %v101
  %vm109 = vmor %vm107, %vm108
  %v110 = vsel %vm109, %v101, %v106
  %v111 = vrsqrt.pop %v96
  %v112 = vmul.f32 %v111, %v96
  %v113 = vmul.f32 %v112, %v111
  %v114 = vmul.f32 0.5, %v113
  %v115 = vsub.f32 1.5, %v114
  %v116 = vmul.f32 %v111, %v115
  %vm117 = vweird.f32 %v96
  %vm118 = vweird.f32 %v111
  %vm119 = vmor %vm117, %vm118
  %v120 = vsel %vm119, %v111, %v116
  %v121 = vrsqrt.pop %v97
  %v122 = vmul.f32 %v121, %v97
  %v123 = vmul.f32 %v122, %v121
  %v124 = vmul.f32 0.5, %v123
  %v125 = vsub.f32 1.5, %v124
  %v126 = vmul.f32 %v121, %v125
  %vm127 = vweird.f32 %v97
  %vm128 = vweird.f32 %v121
  %vm129 = vmor %vm127, %vm128
  %v130 = vsel %vm129, %v121, %v126
  %v131 = vrsqrt.pop %v98
  %v132 = vmul.f32 %v131, %v98
  %v133 = vmul.f32 %v132, %v131
  %v134 = vmul.f32 0.5, %v133
  %v135 = vsub.f32 1.5, %v134
  %v136 = vmul.f32 %v131, %v135
  %vm137 = vweird.f32 %v98
  %vm138 = vweird.f32 %v131
  %vm139 = vmor %vm137, %vm138
  %v140 = vsel %vm139, %v131, %v136
  %v141 = vrsqrt.pop %v99
  %v142 = vmul.f32 %v141, %v99
  %v143 = vmul.f32 %v142, %v141
  %v144 = vmul.f32 0.5, %v143
  %v145 = vsub.f32 1.5, %v144
  %v146 = vmul.f32 %v141, %v145
  %vm147 = vweird.f32 %v99
  %vm148 = vweird.f32 %v141
  %vm149 = vmor %vm147, %vm148
  %v150 = vsel %vm149, %v141, %v146
  %v151 = vrsqrt.pop %v100
  %v152 = vmul.f32 %v151, %v100
  %v153 = vmul.f32 %v152, %v151
  %v154 = vmul.f32 0.5, %v153
  %v155 = vsub.f32 1.5, %v154
  %v156 = vmul.f32 %v151, %v155
  %vm157 = vweird.f32 %v100
  %vm158 = vweird.f32 %v151
  %vm159 = vmor %vm157, %vm158
  %v160 = vsel %vm159, %v151, %v156
  %v161 = vmul.f32 %v59, %v110
  %v162 = vmul.f32 %v60, %v120
  %v163 = vmul.f32 %v61, %v130
  %v164 = vmul.f32 %v62, %v140
  %v165 = vmul.f32 %v63, %v150
  %v166 = vmul.f32 %v64, %v160
  %v167 = vld [vmem:[%s2] sm:$0x1]
  %v169 = vperm.slane %v167, 0
  %v171 = vmul.f32 %v161, %v169
  %v172 = vmul.f32 %v162, %v169
  %v173 = vmul.f32 %v163, %v169
  %v174 = vmul.f32 %v164, %v169
  %v175 = vmul.f32 %v165, %v169
  %v176 = vmul.f32 %v166, %v169
  %v177 = vld [vmem:[%s3] sm:$0x1]
  %v179 = vperm.slane %v177, 0
  %v181 = vadd.f32 %v171, %v179
  %v182 = vadd.f32 %v172, %v179
  %v183 = vadd.f32 %v173, %v179
  %v184 = vadd.f32 %v174, %v179
  %v185 = vadd.f32 %v175, %v179
  %v186 = vadd.f32 %v176, %v179
  %v187 = vpack.c.bf16 %v182, %v181
  %v188 = vpack.c.bf16 %v184, %v183
  %v189 = vpack.c.bf16 %v186, %v185
  %v190 = vld [vmem:[%s1] sm:$0xf]
  %v191 = vld [vmem:[%s1 + $0x4] sm:$0xf]
  %v192 = vld [vmem:[%s1 + $0x8] sm:$0xf]
  %v193 = vld [vmem:[%s1 + $0xc] sm:$0xf]
  %v194 = vld [vmem:[%s4] sm:$0x1]
  %v196 = vperm.slane %v194, 0
  %v202 = vunpack.c.l.b16 %v190
  %v203 = vunpack.c.l.b16 %v191
  %v204 = vunpack.c.l.b16 %v192
  %v205 = vunpack.c.l.b16 %v193
  %v206 = vpack.c.b16 %v203, %v202
  %v207 = vpack.c.b16 %v205, %v204
  %v211 = vsel %vm27, %v187, 0
  %v214 = vsel %vm27, %v188, 0
  %v217 = vsel %vm27, %v189, 0
  %219 = vmatpush.bf16.msra.mxu0 0
  %220 = vmatpush.bf16.msra.mxu0 0
  %221 = vmatpush.bf16.msra.mxu0 0
  %222 = vmatpush.bf16.msra.mxu0 0
  %223 = vmatpush.bf16.msra.mxu0 0
  %224 = vmatpush.bf16.msra.mxu0 0
  %225 = vmatpush.bf16.msra.mxu0 %v207
  %226 = vmatpush.bf16.msra.mxu0 %v206
  %227 = vmatmul.bf16.gmra.mxu0 %v211
  %v228 = vpop.f32.mrf.mxu0
  %v229 = vadd.f32 %v196, %v228
  %v230 = vpop.f32.mrf.mxu0
  %v231 = vadd.f32 %v196, %v230
  %232 = vmatmul.bf16.gmra.mxu0 %v214
  %v233 = vpop.f32.mrf.mxu0
  %v234 = vadd.f32 %v196, %v233
  %v235 = vpop.f32.mrf.mxu0
  %v236 = vadd.f32 %v196, %v235
  %237 = vmatmul.bf16.gmra.mxu0 %v217
  %v238 = vpop.f32.mrf.mxu0
  %v239 = vadd.f32 %v196, %v238
  %v240 = vpop.f32.mrf.mxu0
  %v241 = vadd.f32 %v196, %v240
  %242 = vdwg.mxu0
  %v243 = vmul.f32 %v229, 1.702
  %v244 = vmul.f32 %v231, 1.702
  %v245 = vmul.f32 %v234, 1.702
  %v246 = vmul.f32 %v236, 1.702
  %v247 = vmul.f32 %v239, 1.702
  %v248 = vmul.f32 %v241, 1.702
  %v249 = vxor.u32 %v243, 2147483648
  %v250 = vxor.u32 %v244, 2147483648
  %v251 = vxor.u32 %v245, 2147483648
  %v252 = vxor.u32 %v246, 2147483648
  %v253 = vxor.u32 %v247, 2147483648
  %v254 = vxor.u32 %v248, 2147483648
  %v255 = vmul.f32 %v249, 1.442695
  %v256 = vpow.pop %v255
  %v257 = vmul.f32 %v250, 1.442695
  %v258 = vpow.pop %v257
  %v259 = vmul.f32 %v251, 1.442695
  %v260 = vpow.pop %v259
  %v261 = vmul.f32 %v252, 1.442695
  %v262 = vpow.pop %v261
  %v263 = vmul.f32 %v253, 1.442695
  %v264 = vpow.pop %v263
  %v265 = vmul.f32 %v254, 1.442695
  %v266 = vpow.pop %v265
  %v267 = vadd.f32 %v256, 1.0
  %v268 = vadd.f32 %v258, 1.0
  %v269 = vadd.f32 %v260, 1.0
  %v270 = vadd.f32 %v262, 1.0
  %v271 = vadd.f32 %v264, 1.0
  %v272 = vadd.f32 %v266, 1.0
  %v273 = vrcp.pop %v267
  %v274 = vmul.f32 %v267, %v273
  %v275 = vsub.f32 1.0, %v274
  %v276 = vmul.f32 %v273, %v275
  %v277 = vadd.f32 %v273, %v276
  %vm278 = vweird.f32 %v267
  %vm279 = vweird.f32 %v273
  %vm280 = vmor %vm278, %vm279
  %v281 = vsel %vm280, %v273, %v277
  %v282 = vand.u32 2147483647, %v267
  %vm283 = vcmp.eq.f32.partialorder %v282, 8.507059e+37
  %v284 = vand.u32 %v267, 2147483648
  %v285 = vor.u32 1.1754944e-38, %v284
  %v286 = vsel %vm283, %v285, %v281
  %v287 = vmul.f32 1.0, %v286
  %v288 = vrcp.pop %v268
  %v289 = vmul.f32 %v268, %v288
  %v290 = vsub.f32 1.0, %v289
  %v291 = vmul.f32 %v288, %v290
  %v292 = vadd.f32 %v288, %v291
  %vm293 = vweird.f32 %v268
  %vm294 = vweird.f32 %v288
  %vm295 = vmor %vm293, %vm294
  %v296 = vsel %vm295, %v288, %v292
  %v297 = vand.u32 2147483647, %v268
  %vm298 = vcmp.eq.f32.partialorder %v297, 8.507059e+37
  %v299 = vand.u32 %v268, 2147483648
  %v300 = vor.u32 1.1754944e-38, %v299
  %v301 = vsel %vm298, %v300, %v296
  %v302 = vmul.f32 1.0, %v301
  %v303 = vrcp.pop %v269
  %v304 = vmul.f32 %v269, %v303
  %v305 = vsub.f32 1.0, %v304
  %v306 = vmul.f32 %v303, %v305
  %v307 = vadd.f32 %v303, %v306
  %vm308 = vweird.f32 %v269
  %vm309 = vweird.f32 %v303
  %vm310 = vmor %vm308, %vm309
  %v311 = vsel %vm310, %v303, %v307
  %v312 = vand.u32 2147483647, %v269
  %vm313 = vcmp.eq.f32.partialorder %v312, 8.507059e+37
  %v314 = vand.u32 %v269, 2147483648
  %v315 = vor.u32 1.1754944e-38, %v314
  %v316 = vsel %vm313, %v315, %v311
  %v317 = vmul.f32 1.0, %v316
  %v318 = vrcp.pop %v270
  %v319 = vmul.f32 %v270, %v318
  %v320 = vsub.f32 1.0, %v319
  %v321 = vmul.f32 %v318, %v320
  %v322 = vadd.f32 %v318, %v321
  %vm323 = vweird.f32 %v270
  %vm324 = vweird.f32 %v318
  %vm325 = vmor %vm323, %vm324
  %v326 = vsel %vm325, %v318, %v322
  %v327 = vand.u32 2147483647, %v270
  %vm328 = vcmp.eq.f32.partialorder %v327, 8.507059e+37
  %v329 = vand.u32 %v270, 2147483648
  %v330 = vor.u32 1.1754944e-38, %v329
  %v331 = vsel %vm328, %v330, %v326
  %v332 = vmul.f32 1.0, %v331
  %v333 = vrcp.pop %v271
  %v334 = vmul.f32 %v271, %v333
  %v335 = vsub.f32 1.0, %v334
  %v336 = vmul.f32 %v333, %v335
  %v337 = vadd.f32 %v333, %v336
  %vm338 = vweird.f32 %v271
  %vm339 = vweird.f32 %v333
  %vm340 = vmor %vm338, %vm339
  %v341 = vsel %vm340, %v333, %v337
  %v342 = vand.u32 2147483647, %v271
  %vm343 = vcmp.eq.f32.partialorder %v342, 8.507059e+37
  %v344 = vand.u32 %v271, 2147483648
  %v345 = vor.u32 1.1754944e-38, %v344
  %v346 = vsel %vm343, %v345, %v341
  %v347 = vmul.f32 1.0, %v346
  %v348 = vrcp.pop %v272
  %v349 = vmul.f32 %v272, %v348
  %v350 = vsub.f32 1.0, %v349
  %v351 = vmul.f32 %v348, %v350
  %v352 = vadd.f32 %v348, %v351
  %vm353 = vweird.f32 %v272
  %vm354 = vweird.f32 %v348
  %vm355 = vmor %vm353, %vm354
  %v356 = vsel %vm355, %v348, %v352
  %v357 = vand.u32 2147483647, %v272
  %vm358 = vcmp.eq.f32.partialorder %v357, 8.507059e+37
  %v359 = vand.u32 %v272, 2147483648
  %v360 = vor.u32 1.1754944e-38, %v359
  %v361 = vsel %vm358, %v360, %v356
  %v362 = vmul.f32 1.0, %v361
  %v363 = vmul.f32 %v229, %v287
  %v364 = vmul.f32 %v231, %v302
  %v365 = vmul.f32 %v234, %v317
  %v366 = vmul.f32 %v236, %v332
  %v367 = vmul.f32 %v239, %v347
  %v368 = vmul.f32 %v241, %v362
  %v369 = vpack.c.bf16 %v363, %v363
  %v370 = vpack.c.bf16 %v364, %v364
  %v371 = vpack.c.bf16 %v365, %v365
  %v372 = vpack.c.bf16 %v366, %v366
  %v373 = vpack.c.bf16 %v367, %v367
  %v374 = vpack.c.bf16 %v368, %v368
  %375 = vst [vmem:[%s5] sm:$0xf] %v369
  %376 = vst [vmem:[%s5 + $0x4] sm:$0xf] %v370
  %377 = vst [vmem:[%s5 + $0x8] sm:$0xf] %v371
  %378 = vst [vmem:[%s5 + $0xc] sm:$0xf] %v372
  %379 = vst [vmem:[%s5 + $0x10] sm:$0xf] %v373
  %380 = vst [vmem:[%s5 + $0x14] sm:$0xf] %v374
  // Predicated region
  $region22: #{visual_transformer_forward.18} parent=0 // pred_check
    _
  $region23: #{visual_transformer_forward.18} parent=0 // pred_check_branch
    %382 = sbr.rel (0) target = $region25
  $region24: #{visual_transformer_forward.18} parent=0 // pred_region
    _
  $region25: #{visual_transformer_forward.18} parent=0 // pred_fallthru
    _
  // Predicated region
  $region26: #{visual_transformer_forward.18} parent=0 // pred_check
    _
  $region27: #{visual_transformer_forward.18} parent=0 // pred_check_branch
    %384 = sbr.rel (0) target = $region29
  $region28: #{visual_transformer_forward.18} parent=0 // pred_region
    _
  $region29: #{visual_transformer_forward.18} parent=0 // pred_fallthru
    _

// kernel: visual_transformer_forward.19
$region0: #{visual_transformer_forward.19}
  #allocation0 [shape = 'u32[]', space=smem, size = 0x4, offset = 0x4, fixed_abs, tag = 'smem constant byte address 0x4 - core index']
  #allocation1 [shape = 'u32[72,128]{1,0:T(1,128)}', space=vmem, size = 0x9000, scoped, tag = 'internal scratch']
  %s0 = inlined_call_operand.vmem [shape: bf16[48,128], index: 0, kind: input, shape index: {}]
  %s1 = inlined_call_operand.vmem [shape: bf16[128,32], index: 1, kind: input, shape index: {}]
  %s2 = inlined_call_operand.vmem [shape: f32[1,32], index: 2, kind: input, shape index: {}]
  %s3 = inlined_call_operand.vmem [shape: f32[48,32], index: 3, kind: input, shape index: {}]
  %s4 = inlined_call_operand.vmem [shape: f32[48,32], index: 4, kind: output, shape index: {}]
  %s5 = sld [smem:[#allocation0]]
  $region26: #{visual_transformer_forward.19} parent=0
    _
  %s7 = ssub.s32 1, %s5
  %s8 = scalar_select 0, %s7, %s5
  // Predicated region
  $region2: #{visual_transformer_forward.19} parent=0 // pred_check
    _
  $region3: #{visual_transformer_forward.19} parent=0 // pred_check_branch
    %10 = sbr.rel (0) target = $region5
  $region4: #{visual_transformer_forward.19} parent=0 // pred_region
    _
  $region5: #{visual_transformer_forward.19} parent=0 // pred_fallthru
    _
  // Predicated region
  $region6: #{visual_transformer_forward.19} parent=0 // pred_check
    _
  $region7: #{visual_transformer_forward.19} parent=0 // pred_check_branch
    %12 = sbr.rel (0) target = $region9
  $region8: #{visual_transformer_forward.19} parent=0 // pred_region
    _
  $region9: #{visual_transformer_forward.19} parent=0 // pred_fallthru
    _
  // Predicated region
  $region10: #{visual_transformer_forward.19} parent=0 // pred_check
    _
  $region11: #{visual_transformer_forward.19} parent=0 // pred_check_branch
    %14 = sbr.rel (0) target = $region13
  $region12: #{visual_transformer_forward.19} parent=0 // pred_region
    _
  $region13: #{visual_transformer_forward.19} parent=0 // pred_fallthru
    _
  // Predicated region
  $region14: #{visual_transformer_forward.19} parent=0 // pred_check
    _
  $region15: #{visual_transformer_forward.19} parent=0 // pred_check_branch
    %16 = sbr.rel (0) target = $region17
  $region16: #{visual_transformer_forward.19} parent=0 // pred_region
    _
  $region17: #{visual_transformer_forward.19} parent=0 // pred_fallthru
    _
  %v17 = vld [vmem:[%s0] sm:$0xf]
  %v18 = vld [vmem:[%s0 + $0x4] sm:$0xf]
  %v19 = vld [vmem:[%s0 + $0x8] sm:$0xf]
  %v20 = vld [vmem:[%s0 + $0xc] sm:$0xf]
  %v21 = vld [vmem:[%s0 + $0x10] sm:$0xf]
  %v22 = vld [vmem:[%s0 + $0x14] sm:$0xf]
  %v23 = vld [vmem:[%s1] sm:$0xf]
  %v24 = vld [vmem:[%s1 + $0x4] sm:$0xf]
  %v25 = vld [vmem:[%s1 + $0x8] sm:$0xf]
  %v26 = vld [vmem:[%s1 + $0xc] sm:$0xf]
  %v27 = vld [vmem:[%s1 + $0x10] sm:$0xf]
  %v28 = vld [vmem:[%s1 + $0x14] sm:$0xf]
  %v29 = vld [vmem:[%s1 + $0x18] sm:$0xf]
  %v30 = vld [vmem:[%s1 + $0x1c] sm:$0xf]
  %v31 = vld [vmem:[%s1 + $0x20] sm:$0xf]
  %v32 = vld [vmem:[%s1 + $0x24] sm:$0xf]
  %v33 = vld [vmem:[%s1 + $0x28] sm:$0xf]
  %v34 = vld [vmem:[%s1 + $0x2c] sm:$0xf]
  %v35 = vld [vmem:[%s1 + $0x30] sm:$0xf]
  %v36 = vld [vmem:[%s1 + $0x34] sm:$0xf]
  %v37 = vld [vmem:[%s1 + $0x38] sm:$0xf]
  %v38 = vld [vmem:[%s1 + $0x3c] sm:$0xf]
  %v39 = vld [vmem:[%s2] sm:$0x1]
  %v41 = vperm.slane %v39, 0
  %v49 = vunpack.c.l.b16 %v17
  %v50 = vunpack.c.l.b16 %v18
  %v51 = vunpack.c.l.b16 %v19
  %v52 = vunpack.c.l.b16 %v20
  %v53 = vunpack.c.l.b16 %v21
  %v54 = vunpack.c.l.b16 %v22
  %v55 = vpack.c.b16 %v50, %v49
  %v56 = vpack.c.b16 %v52, %v51
  %v57 = vpack.c.b16 %v54, %v53
  %v77 = vunpack.c.l.b16 %v23
  %v78 = vunpack.c.l.b16 %v24
  %v79 = vunpack.c.l.b16 %v25
  %v80 = vunpack.c.l.b16 %v26
  %v81 = vunpack.c.l.b16 %v27
  %v82 = vunpack.c.l.b16 %v28
  %v83 = vunpack.c.l.b16 %v29
  %v84 = vunpack.c.l.b16 %v30
  %v85 = vunpack.c.l.b16 %v31
  %v86 = vunpack.c.l.b16 %v32
  %v87 = vunpack.c.l.b16 %v33
  %v88 = vunpack.c.l.b16 %v34
  %v89 = vunpack.c.l.b16 %v35
  %v90 = vunpack.c.l.b16 %v36
  %v91 = vunpack.c.l.b16 %v37
  %v92 = vunpack.c.l.b16 %v38
  %v93 = vpack.c.b16 %v78, %v77
  %v94 = vpack.c.b16 %v80, %v79
  %v95 = vpack.c.b16 %v82, %v81
  %v96 = vpack.c.b16 %v84, %v83
  %v97 = vpack.c.b16 %v86, %v85
  %v98 = vpack.c.b16 %v88, %v87
  %v99 = vpack.c.b16 %v90, %v89
  %v100 = vpack.c.b16 %v92, %v91
  %109 = vmatpush.bf16.msra.mxu0 %v100
  %110 = vmatpush.bf16.msra.mxu0 %v99
  %111 = vmatpush.bf16.msra.mxu0 %v98
  %112 = vmatpush.bf16.msra.mxu0 %v97
  %113 = vmatpush.bf16.msra.mxu0 %v96
  %114 = vmatpush.bf16.msra.mxu0 %v95
  %115 = vmatpush.bf16.msra.mxu0 %v94
  %116 = vmatpush.bf16.msra.mxu0 %v93
  %117 = vmatmul.bf16.gmra.mxu0 %v55
  %v118 = vpop.f32.mrf.mxu0
  %v119 = vadd.f32 %v41, %v118
  %v120 = vpop.f32.mrf.mxu0
  %v121 = vadd.f32 %v41, %v120
  %122 = vmatmul.bf16.gmra.mxu0 %v56
  %v123 = vpop.f32.mrf.mxu0
  %v124 = vadd.f32 %v41, %v123
  %v125 = vpop.f32.mrf.mxu0
  %v126 = vadd.f32 %v41, %v125
  %127 = vmatmul.bf16.gmra.mxu0 %v57
  %v128 = vpop.f32.mrf.mxu0
  %v129 = vadd.f32 %v41, %v128
  %v130 = vpop.f32.mrf.mxu0
  %v131 = vadd.f32 %v41, %v130
  %132 = vdwg.mxu0
  %v133 = vld [vmem:[%s3] sm:$0xff]
  %v134 = vld [vmem:[%s3 + $0x8] sm:$0xff]
  %v135 = vld [vmem:[%s3 + $0x10] sm:$0xff]
  %v136 = vld [vmem:[%s3 + $0x18] sm:$0xff]
  %v137 = vld [vmem:[%s3 + $0x20] sm:$0xff]
  %v138 = vld [vmem:[%s3 + $0x28] sm:$0xff]
  %v139 = vadd.f32 %v119, %v133
  %v140 = vadd.f32 %v121, %v134
  %v141 = vadd.f32 %v124, %v135
  %v142 = vadd.f32 %v126, %v136
  %v143 = vadd.f32 %v129, %v137
  %v144 = vadd.f32 %v131, %v138
  %vm145 = vcmask 261120
  %146 = vst.msk [vmem:[%s4] sm:$0xff] %vm145, %v139
  %147 = vst.msk [vmem:[%s4 + $0x8] sm:$0xff] %vm145, %v140
  %148 = vst.msk [vmem:[%s4 + $0x10] sm:$0xff] %vm145, %v141
  %149 = vst.msk [vmem:[%s4 + $0x18] sm:$0xff] %vm145, %v142
  %150 = vst.msk [vmem:[%s4 + $0x20] sm:$0xff] %vm145, %v143
  %151 = vst.msk [vmem:[%s4 + $0x28] sm:$0xff] %vm145, %v144
  // Predicated region
  $region18: #{visual_transformer_forward.19} parent=0 // pred_check
    _
  $region19: #{visual_transformer_forward.19} parent=0 // pred_check_branch
    %153 = sbr.rel (0) target = $region21
  $region20: #{visual_transformer_forward.19} parent=0 // pred_region
    _
  $region21: #{visual_transformer_forward.19} parent=0 // pred_fallthru
    _
  // Predicated region
  $region22: #{visual_transformer_forward.19} parent=0 // pred_check
    _
  $region23: #{visual_transformer_forward.19} parent=0 // pred_check_branch
    %155 = sbr.rel (0) target = $region25
  $region24: #{visual_transformer_forward.19} parent=0 // pred_region
    _
  $region25: #{visual_transformer_forward.19} parent=0 // pred_fallthru
    _

// kernel: visual_transformer_forward.25
$region0: #{visual_transformer_forward.25}
  #allocation0 [shape = 'u32[]', space=smem, size = 0x4, offset = 0x4, fixed_abs, tag = 'smem constant byte address 0x4 - core index']
  #allocation1 [shape = 'u32[72,128]{1,0:T(1,128)}', space=vmem, size = 0x9000, scoped, tag = 'internal scratch']
  %s0 = inlined_call_operand.vmem [shape: f32[8,32], index: 0, kind: input, shape index: {}]
  %s1 = inlined_call_operand.vmem [shape: bf16[32,16], index: 1, kind: input, shape index: {}]
  %s2 = inlined_call_operand.vmem [shape: f32[1,32], index: 2, kind: input, shape index: {}]
  %s3 = inlined_call_operand.vmem [shape: f32[1,32], index: 3, kind: input, shape index: {}]
  %s4 = inlined_call_operand.vmem [shape: f32[8,16], index: 4, kind: output, shape index: {}]
  %s5 = sld [smem:[#allocation0]]
  $region26: #{visual_transformer_forward.25} parent=0
    _
  %s7 = ssub.s32 1, %s5
  %s8 = scalar_select 0, %s7, %s5
  // Predicated region
  $region2: #{visual_transformer_forward.25} parent=0 // pred_check
    _
  $region3: #{visual_transformer_forward.25} parent=0 // pred_check_branch
    %10 = sbr.rel (0) target = $region5
  $region4: #{visual_transformer_forward.25} parent=0 // pred_region
    _
  $region5: #{visual_transformer_forward.25} parent=0 // pred_fallthru
    _
  // Predicated region
  $region6: #{visual_transformer_forward.25} parent=0 // pred_check
    _
  $region7: #{visual_transformer_forward.25} parent=0 // pred_check_branch
    %12 = sbr.rel (0) target = $region9
  $region8: #{visual_transformer_forward.25} parent=0 // pred_region
    _
  $region9: #{visual_transformer_forward.25} parent=0 // pred_fallthru
    _
  // Predicated region
  $region10: #{visual_transformer_forward.25} parent=0 // pred_check
    _
  $region11: #{visual_transformer_forward.25} parent=0 // pred_check_branch
    %14 = sbr.rel (0) target = $region13
  $region12: #{visual_transformer_forward.25} parent=0 // pred_region
    _
  $region13: #{visual_transformer_forward.25} parent=0 // pred_fallthru
    _
  // Predicated region
  $region14: #{visual_transformer_forward.25} parent=0 // pred_check
    _
  $region15: #{visual_transformer_forward.25} parent=0 // pred_check_branch
    %16 = sbr.rel (0) target = $region17
  $region16: #{visual_transformer_forward.25} parent=0 // pred_region
    _
  $region17: #{visual_transformer_forward.25} parent=0 // pred_fallthru
    _
  %v18 = vld [vmem:[%s0] sm:$0xff]
  %vm19 = vcmask 261120
  %v20 = vsel %vm19, %v18, 0.0
  %21 = vadd.xlane.f32.xlu0 %v20
  %v22 = vpop.xlane.xlu0 %21
  %v23 = vrcp.pop 32.0
  %v24 = vmul.f32 32.0, %v23
  %v25 = vsub.f32 1.0, %v24
  %v26 = vmul.f32 %v23, %v25
  %v27 = vadd.f32 %v23, %v26
  %vm28 = vweird.f32 %v23
  %v29 = vsel %vm28, %v23, %v27
  %v30 = vmul.f32 %v22, %v29
  %v31 = vsub.f32 %v18, %v30
  %v32 = vmul.f32 %v31, %v31
  %v33 = vsel %vm19, %v32, 0.0
  %34 = vadd.xlane.f32.xlu0 %v33
  %v35 = vpop.xlane.xlu0 %34
  %v36 = vmul.f32 %v35, %v29
  %v37 = vadd.f32 %v36, 1e-07
  %v38 = vrsqrt.pop %v37
  %v39 = vmul.f32 %v38, %v37
  %v40 = vmul.f32 %v39, %v38
  %v41 = vmul.f32 0.5, %v40
  %v42 = vsub.f32 1.5, %v41
  %v43 = vmul.f32 %v38, %v42
  %vm44 = vweird.f32 %v37
  %vm45 = vweird.f32 %v38
  %vm46 = vmor %vm44, %vm45
  %v47 = vsel %vm46, %v38, %v43
  %v48 = vmul.f32 %v31, %v47
  %v49 = vld [vmem:[%s2] sm:$0x1]
  %v51 = vperm.slane %v49, 0
  %v53 = vmul.f32 %v48, %v51
  %v54 = vld [vmem:[%s3] sm:$0x1]
  %v56 = vperm.slane %v54, 0
  %v58 = vadd.f32 %v53, %v56
  %v59 = vpack.c.bf16 %v58, %v58
  %v60 = vld [vmem:[%s1] sm:$0xf]
  %v61 = vld [vmem:[%s1 + $0x4] sm:$0xf]
  %v62 = vld [vmem:[%s1 + $0x8] sm:$0xf]
  %v63 = vld [vmem:[%s1 + $0xc] sm:$0xf]
  %v68 = vunpack.c.l.b16 %v60
  %v69 = vunpack.c.l.b16 %v61
  %v70 = vunpack.c.l.b16 %v62
  %v71 = vunpack.c.l.b16 %v63
  %v72 = vpack.c.b16 %v69, %v68
  %v73 = vpack.c.b16 %v71, %v70
  %v77 = vsel %vm19, %v59, 0
  %79 = vmatpush.bf16.msra.mxu0 0
  %80 = vmatpush.bf16.msra.mxu0 0
  %81 = vmatpush.bf16.msra.mxu0 0
  %82 = vmatpush.bf16.msra.mxu0 0
  %83 = vmatpush.bf16.msra.mxu0 0
  %84 = vmatpush.bf16.msra.mxu0 0
  %85 = vmatpush.bf16.msra.mxu0 %v73
  %86 = vmatpush.bf16.msra.mxu0 %v72
  %87 = vmatmul.bf16.gmra.mxu0 %v77
  %v88 = vpop.f32.mrf.mxu0
  %v89 = vadd.f32 0.0, %v88
  %v90 = vpop.f32.mrf.mxu0
  %91 = vdwg.mxu0
  %vm92 = vcmask 130048
  %93 = vst.msk [vmem:[%s4] sm:$0xff] %vm92, %v89
  // Predicated region
  $region18: #{visual_transformer_forward.25} parent=0 // pred_check
    _
  $region19: #{visual_transformer_forward.25} parent=0 // pred_check_branch
    %95 = sbr.rel (0) target = $region21
  $region20: #{visual_transformer_forward.25} parent=0 // pred_region
    _
  $region21: #{visual_transformer_forward.25} parent=0 // pred_fallthru
    _
  // Predicated region
  $region22: #{visual_transformer_forward.25} parent=0 // pred_check
    _
  $region23: #{visual_transformer_forward.25} parent=0 // pred_check_branch
    %97 = sbr.rel (0) target = $region25
  $region24: #{visual_transformer_forward.25} parent=0 // pred_region
    _
  $region25: #{visual_transformer_forward.25} parent=0 // pred_fallthru
    _

</llo_original>
